<compile_context>
chip_gen: v7x
topology: tpu7x:2x2x1
jax: 0.10.0
libtpu: 0.0.40
codegen_flags: <defaults>
</compile_context>

<pallas_src>
import functools

import jax
import jax.numpy as jnp
from jax.experimental import pallas as pl
from jax.experimental.pallas import tpu as pltpu


def _round_up(x, m):
    return (x + m - 1) // m * m


def _vmem_limit(nbytes):
    # Explicit scoped-VMEM budget: 2x the estimated live footprint, floored at
    # 32 MiB and capped at 64 MiB (v7x physical VMEM per TensorCore).
    return int(min(max(2 * nbytes, 32 * 1024 * 1024), 64 * 1024 * 1024))


# -----------------------------------------------------------------------------
# Kernel 1: plain matmul + bias [+ ReLU]  (used for strided conv1 / 1x1 shortcut)
# -----------------------------------------------------------------------------
def _matmul_bn_kernel(p_ref, w_ref, b_ref, o_ref, *, apply_relu):
    acc = jnp.dot(p_ref[...], w_ref[...], preferred_element_type=jnp.float32)
    acc = acc + b_ref[...]                  # folded-BN bias (scale is in weights)
    if apply_relu:
        acc = jnp.maximum(acc, 0.0)
    o_ref[...] = acc.astype(o_ref.dtype)


def matmul_bn_pallas(patches, w_p, bias_row, *, apply_relu, out_dtype, tile_m=512):
    """patches: (M, k) bf16 ; w_p: (k_p, cout_p) bf16 (scale folded, pre-padded);
       bias_row: (1, cout_p) f32.  Returns (M, cout_p) in out_dtype."""
    m, kdim = patches.shape
    kdim_p, cout_p = w_p.shape
    if m <= tile_m:
        # Split small M into (at least) two tiles so the v7x megacore can shard
        # the "parallel" grid axis across both TensorCores.
        tile_m = max(16, _round_up(pl.cdiv(m, 2), 16))
    m_p = _round_up(m, tile_m)

    # Single pad producing bf16 (no extra full-size zero-copy).
    patches_p = jnp.pad(patches, ((0, m_p - m), (0, kdim_p - kdim)))
    out_bytes = jnp.dtype(out_dtype).itemsize

    vmem = (2 * tile_m * kdim_p * 2 + 2 * kdim_p * cout_p * 2
            + 2 * cout_p * 4 + 2 * tile_m * cout_p * out_bytes)
    cost = pl.CostEstimate(
        flops=2 * m_p * kdim_p * cout_p,
        transcendentals=0,
        bytes_accessed=(m_p * kdim_p * 2 + kdim_p * cout_p * 2
                        + cout_p * 4 + m_p * cout_p * out_bytes))

    out = pl.pallas_call(
        functools.partial(_matmul_bn_kernel, apply_relu=apply_relu),
        out_shape=jax.ShapeDtypeStruct((m_p, cout_p), out_dtype),
        grid=(m_p // tile_m,),
        in_specs=[
            pl.BlockSpec((tile_m, kdim_p), lambda i: (i, 0)),
            pl.BlockSpec((kdim_p, cout_p), lambda i: (0, 0)),
            pl.BlockSpec((1, cout_p), lambda i: (0, 0)),
        ],
        out_specs=pl.BlockSpec((tile_m, cout_p), lambda i: (i, 0)),
        compiler_params=pltpu.CompilerParams(
            dimension_semantics=("parallel",),
            vmem_limit_bytes=_vmem_limit(vmem)),
        cost_estimate=cost,
    )(patches_p, w_p, bias_row)
    return out[:m]


# -----------------------------------------------------------------------------
# Kernel 2: 3x3 stride-1 conv with in-VMEM tap gather + bias [+ residual] [+ ReLU]
# (no 9x-duplicated im2col matrix ever touches HBM)
# -----------------------------------------------------------------------------
def _conv3x3_bn_kernel(*refs, ho, wo, cp, apply_relu, add_residual):
    if add_residual:
        x_ref, w_ref, b_ref, r_ref, o_ref = refs
    else:
        x_ref, w_ref, b_ref, o_ref = refs
        r_ref = None
    # Build the 9 taps in VMEM from the halo'd tile (shifted static slices),
    # then do ONE MXU matmul over the (tap-major, channel-minor) contraction.
    taps = []
    for kh in range(3):
        for kw in range(3):
            taps.append(x_ref[kh:kh + ho, kw:kw + wo, :])
    patches = jnp.concatenate(taps, axis=-1).reshape(ho * wo, 9 * cp)
    acc = jnp.dot(patches, w_ref[...], preferred_element_type=jnp.float32)
    acc = acc + b_ref[...]
    if add_residual:
        acc = acc + r_ref[...].astype(jnp.float32)
    if apply_relu:
        acc = jnp.maximum(acc, 0.0)
    o_ref[...] = acc.astype(o_ref.dtype)


def conv3x3_bn_pallas(x_pad, w_p, bias_row, residual=None, *, apply_relu, out_dtype):
    """x_pad: (N, H+2, W+2, C_p) bf16 (1-pixel spatial halo, lane-padded channels)
       w_p: (9*C_p, cout_p) bf16 (BN scale folded, tap-major / channel-minor)
       bias_row: (1, cout_p) f32 ; residual: (N*H*W, cout_p) bf16 or None.
       Returns (N*H*W, cout_p) in out_dtype."""
    n, hp2, wp2, cp = x_pad.shape
    ho, wo = hp2 - 2, wp2 - 2
    kdim, cout_p = w_p.shape
    assert kdim == 9 * cp
    rows = ho * wo
    assert rows % 8 == 0 or n == 1, "per-image row count must be sublane aligned"
    out_bytes = jnp.dtype(out_dtype).itemsize

    inputs = [x_pad, w_p, bias_row]
    in_specs = [
        pl.BlockSpec((None, hp2, wp2, cp), lambda b: (b, 0, 0, 0)),
        pl.BlockSpec((kdim, cout_p), lambda b: (0, 0)),
        pl.BlockSpec((1, cout_p), lambda b: (0, 0)),
    ]
    res_bytes = 0
    if residual is not None:
        inputs.append(residual)
        in_specs.append(pl.BlockSpec((rows, cout_p), lambda b: (b, 0)))
        res_bytes = residual.size * residual.dtype.itemsize

    vmem = (2 * hp2 * wp2 * cp * 2 + 2 * kdim * cout_p * 2 + 2 * cout_p * 4
            + 2 * rows * cout_p * 2 + 2 * rows * cout_p * out_bytes
            + rows * kdim * 2)                       # in-VMEM patch matrix
    cost = pl.CostEstimate(
        flops=2 * n * rows * kdim * cout_p,
        transcendentals=0,
        bytes_accessed=(x_pad.size * 2 + kdim * cout_p * 2 + cout_p * 4
                        + res_bytes + n * rows * cout_p * out_bytes))

    out = pl.pallas_call(
        functools.partial(_conv3x3_bn_kernel, ho=ho, wo=wo, cp=cp,
                          apply_relu=apply_relu,
                          add_residual=residual is not None),
        out_shape=jax.ShapeDtypeStruct((n * rows, cout_p), out_dtype),
        grid=(n,),
        in_specs=in_specs,
        out_specs=pl.BlockSpec((rows, cout_p), lambda b: (b, 0)),
        compiler_params=pltpu.CompilerParams(
            dimension_semantics=("parallel",),
            vmem_limit_bytes=_vmem_limit(vmem)),
        cost_estimate=cost,
    )(*inputs)
    return out


# -----------------------------------------------------------------------------
# One-time parameter prep (hoisted out of the per-forward path)
# -----------------------------------------------------------------------------
def fold_bn(gamma, beta, mean, var, eps=1e-5):
    scale = gamma / jnp.sqrt(var + eps)
    bias = beta - mean * scale
    return scale, bias


def _prep_bias(bias, cout_p):
    return jnp.pad(bias.astype(jnp.float32), (0, cout_p - bias.shape[0]))[None, :]


def _prep_matmul_weight(w2d, scale, cout_p):
    k, cout = w2d.shape
    k_p = _round_up(k, 128)
    w = w2d.astype(jnp.float32) * scale.astype(jnp.float32)[None, :]
    return jnp.pad(w, ((0, k_p - k), (0, cout_p - cout))).astype(jnp.bfloat16)


def _prep_gather_weight(w_hwio, scale, cin_p, cout_p):
    kh, kw, cin, cout = w_hwio.shape
    w = w_hwio.astype(jnp.float32) * scale.astype(jnp.float32)[None, None, None, :]
    w = jnp.pad(w, ((0, 0), (0, 0), (0, cin_p - cin), (0, cout_p - cout)))
    return w.reshape(kh * kw * cin_p, cout_p).astype(jnp.bfloat16)


def prepare_block_params(params, stride):
    """Fold BN (running stats) into the conv weights, pad to lane-aligned
    shapes, cast to bf16.  Done once per model, NOT per forward pass."""
    w1 = params["w1"]
    cin, planes = w1.shape[2], w1.shape[3]
    cout_p = _round_up(planes, 128)
    s1, b1 = fold_bn(*params["bn1"])
    s2, b2 = fold_bn(*params["bn2"])
    prepared = {}
    if stride == 1:                       # conv1 uses the in-kernel tap gather
        cin_p = _round_up(cin, 128)
        prepared["w1"] = _prep_gather_weight(w1, s1, cin_p, cout_p)
    else:                                 # strided conv1 uses the im2col path
        prepared["w1"] = _prep_matmul_weight(w1.reshape(9 * cin, planes), s1, cout_p)
    prepared["b1"] = _prep_bias(b1, cout_p)
    prepared["w2"] = _prep_gather_weight(params["w2"], s2, cout_p, cout_p)
    prepared["b2"] = _prep_bias(b2, cout_p)
    if stride != 1 or cin != planes:
        ss, bs = fold_bn(*params["bns"])
        prepared["ws"] = _prep_matmul_weight(params["ws"].reshape(cin, planes), ss, cout_p)
        prepared["bs"] = _prep_bias(bs, cout_p)
    return prepared


# -----------------------------------------------------------------------------
# Plain-JAX glue: packed im2col (only for the strided conv1 and 1x1 shortcut)
# -----------------------------------------------------------------------------
def im2col_packed(x_nhwc, ksize, stride, padding):
    """Tap-major packed patches (N*Ho*Wo, ksize*ksize*C) in x's dtype."""
    n, h, w, c = x_nhwc.shape
    if padding > 0:
        x_nhwc = jnp.pad(x_nhwc, ((0, 0), (padding, padding), (padding, padding), (0, 0)))
    ho = (h + 2 * padding - ksize) // stride + 1
    wo = (w + 2 * padding - ksize) // stride + 1
    taps = []
    for kh in range(ksize):
        for kw in range(ksize):
            taps.append(x_nhwc[:, kh: kh + (ho - 1) * stride + 1: stride,
                               kw: kw + (wo - 1) * stride + 1: stride, :])
    packed = jnp.concatenate(taps, axis=-1).reshape(n * ho * wo, ksize * ksize * c)
    return packed, (n, ho, wo)


# -----------------------------------------------------------------------------
# BasicBlock forward (public interface: NCHW, like PyTorch)
# -----------------------------------------------------------------------------
@functools.partial(jax.jit, static_argnames=("stride", "planes"))
def basic_block_forward(x_nchw, prepared, *, stride, planes):
    x = jnp.transpose(x_nchw, (0, 2, 3, 1)).astype(jnp.bfloat16)   # NHWC, bf16 once
    n, h, w, cin = x.shape
    cout_p = prepared["w2"].shape[1]
    ho = (h + 2 - 3) // stride + 1
    wo = (w + 2 - 3) // stride + 1

    # ---- conv1 (3x3, stride) + bn1 + relu1 -> bf16 intermediate ------------
    if stride == 1:
        cin_p = prepared["w1"].shape[0] // 9
        x_pad = jnp.pad(x, ((0, 0), (1, 1), (1, 1), (0, cin_p - cin)))
        out1 = conv3x3_bn_pallas(x_pad, prepared["w1"], prepared["b1"],
                                 apply_relu=True, out_dtype=jnp.bfloat16)
    else:
        p1, _ = im2col_packed(x, 3, stride, 1)
        out1 = matmul_bn_pallas(p1, prepared["w1"], prepared["b1"],
                                apply_relu=True, out_dtype=jnp.bfloat16)
    # out1: (n*ho*wo, cout_p) bf16; padded channels are exactly zero.

    # ---- shortcut branch -> bf16 residual -----------------------------------
    if "ws" in prepared:
        ps, _ = im2col_packed(x, 1, stride, 0)
        res = matmul_bn_pallas(ps, prepared["ws"], prepared["bs"],
                               apply_relu=False, out_dtype=jnp.bfloat16)
    else:  # identity shortcut (stride==1, cin==planes)
        res = jnp.pad(x.reshape(n * h * w, cin), ((0, 0), (0, cout_p - cin)))

    # ---- conv2 (3x3, stride 1) + bn2 + residual add + relu2 (fully fused) ---
    out1_pad = jnp.pad(out1.reshape(n, ho, wo, cout_p),
                       ((0, 0), (1, 1), (1, 1), (0, 0)))
    out2 = conv3x3_bn_pallas(out1_pad, prepared["w2"], prepared["b2"], res,
                             apply_relu=True, out_dtype=jnp.float32)

    out = out2[:, :planes].reshape(n, ho, wo, planes)
    return jnp.transpose(out, (0, 3, 1, 2))  # -> NCHW


# -----------------------------------------------------------------------------
# Pure-JAX f32 reference (for correctness check)
# -----------------------------------------------------------------------------
def basic_block_reference(x_nchw, params, stride):
    x = jnp.transpose(x_nchw, (0, 2, 3, 1))
    dn = ("NHWC", "HWIO", "NHWC")

    def conv(inp, w, s):
        return jax.lax.conv_general_dilated(
            inp, w, (s, s),
            padding=[(w.shape[0] // 2,) * 2, (w.shape[1] // 2,) * 2],
            dimension_numbers=dn)

    s1, b1 = fold_bn(*params["bn1"])
    s2, b2 = fold_bn(*params["bn2"])
    out = jnp.maximum(conv(x, params["w1"], stride) * s1 + b1, 0.0)
    out = conv(out, params["w2"], 1) * s2 + b2
    in_planes, planes = params["w1"].shape[2], params["w1"].shape[3]
    if stride != 1 or in_planes != planes:
        ss, bs = fold_bn(*params["bns"])
        res = conv(x, params["ws"], stride) * ss + bs
    else:
        res = x
    out = jnp.maximum(out + res, 0.0)
    return jnp.transpose(out, (0, 3, 1, 2))


# -----------------------------------------------------------------------------
def make_params(key, in_planes, planes, stride):
    ks = jax.random.split(key, 16)
    f32 = jnp.float32

    def bn_params(k0, k1, k2, k3, c):
        gamma = jax.random.uniform(k0, (c,), f32, 0.5, 1.5)
        beta = 0.1 * jax.random.normal(k1, (c,), f32)
        mean = 0.1 * jax.random.normal(k2, (c,), f32)
        var = jax.random.uniform(k3, (c,), f32, 0.5, 1.5)
        return (gamma, beta, mean, var)

    params = {
        # weights stored HWIO (kh, kw, Cin, Cout)
        "w1": 0.1 * jax.random.normal(ks[0], (3, 3, in_planes, planes), f32),
        "w2": 0.1 * jax.random.normal(ks[1], (3, 3, planes, planes), f32),
        "bn1": bn_params(ks[2], ks[3], ks[4], ks[5], planes),
        "bn2": bn_params(ks[6], ks[7], ks[8], ks[9], planes),
    }
    if stride != 1 or in_planes != planes:
        params["ws"] = 0.1 * jax.random.normal(ks[10], (1, 1, in_planes, planes), f32)
        params["bns"] = bn_params(ks[11], ks[12], ks[13], ks[14], planes)
    return params


if __name__ == "__main__":
    key = jax.random.PRNGKey(0)

    def run_case(case_key, n, in_planes, planes, hw, stride, tag):
        k_x, k_p = jax.random.split(case_key)
        x = jax.random.normal(k_x, (n, in_planes, hw, hw), jnp.float32)  # NCHW
        params = make_params(k_p, in_planes, planes, stride)
        prepared = prepare_block_params(params, stride)     # one-time prep
        out = jax.block_until_ready(
            basic_block_forward(x, prepared, stride=stride, planes=planes))
        ref = jax.block_until_ready(basic_block_reference(x, params, stride))
        assert out.shape == (n, planes, hw // stride, hw // stride), (tag, out.shape)
        # bf16 MXU operands / bf16 intermediates (f32 accumulate) -> relaxed tol.
        max_err = float(jnp.max(jnp.abs(out - ref)))
        assert max_err < 5e-2, f"{tag}: max abs error {max_err}"

    k1, k2 = jax.random.split(key)
    # Downsampling block: stride 2, 1x1-conv shortcut (im2col path for conv1/shortcut).
    run_case(k1, 2, 4, 8, 16, 2, "stride2")
    # Identity block: stride 1 -> in-kernel tap-gather path for BOTH 3x3 convs.
    run_case(k2, 2, 8, 8, 8, 1, "stride1")

    print("KERNEL_OK")
</pallas_src>

<mosaic_0001>
module attributes {stable_mosaic.version = 11 : i64} {
  func.func @_matmul_bn_kernel(%arg0: i32, %arg1: memref<64x128xbf16, #tpu.memory_space<vmem>>, %arg2: memref<128x128xbf16, #tpu.memory_space<vmem>>, %arg3: memref<1x128xf32, #tpu.memory_space<vmem>>, %arg4: memref<64x128xbf16, #tpu.memory_space<vmem>>) attributes {dimension_semantics = [#tpu.dimension_semantics<parallel>], iteration_bounds = array<i64: 2>, scalar_prefetch = 0 : i64, scratch_operands = 0 : i64, tpu.core_type = #tpu.core_type<tc>, window_params = [{transform_indices = @transform_0, window_bounds = array<i64: 64, 128>}, {pipeline_mode = #tpu.pipeline_mode<synchronous>, transform_indices = @transform_1, window_bounds = array<i64: 128, 128>}, {pipeline_mode = #tpu.pipeline_mode<synchronous>, transform_indices = @transform_2, window_bounds = array<i64: 1, 128>}, {transform_indices = @transform_3, window_bounds = array<i64: 64, 128>}]} {
    %c0 = arith.constant 0 : index
    %c0_0 = arith.constant 0 : index
    %0 = vector.load %arg1[%c0, %c0_0] : memref<64x128xbf16, #tpu.memory_space<vmem>>, vector<64x128xbf16>
    %c0_1 = arith.constant 0 : index
    %c0_2 = arith.constant 0 : index
    %1 = vector.load %arg2[%c0_1, %c0_2] : memref<128x128xbf16, #tpu.memory_space<vmem>>, vector<128x128xbf16>
    %cst = arith.constant dense<0.000000e+00> : vector<64x128xf32>
    %2 = tpu.matmul %0, %1, %cst {dimension_numbers = #tpu.dot_dimension_numbers<[1], [0], [0], [1], [0, 0, 1, 1], [], []>} : vector<64x128xbf16>, vector<128x128xbf16>, vector<64x128xf32> -> vector<64x128xf32>
    %c0_3 = arith.constant 0 : index
    %c0_4 = arith.constant 0 : index
    %3 = vector.load %arg3[%c0_3, %c0_4] : memref<1x128xf32, #tpu.memory_space<vmem>>, vector<1x128xf32>
    %4 = vector.broadcast %3 : vector<1x128xf32> to vector<64x128xf32>
    %5 = arith.addf %2, %4 : vector<64x128xf32>
    %cst_5 = arith.constant 0.000000e+00 : f32
    %6 = vector.broadcast %cst_5 : f32 to vector<64x128xf32>
    %7 = arith.maximumf %5, %6 : vector<64x128xf32>
    %8 = arith.truncf %7 : vector<64x128xf32> to vector<64x128xbf16>
    %c0_6 = arith.constant 0 : index
    %c0_7 = arith.constant 0 : index
    %9 = vector.load %arg4[%c0_6, %c0_7] : memref<64x128xbf16, #tpu.memory_space<vmem>>, vector<64x128xbf16>
    tpu.vector_store %arg4[%c0_6, %c0_7], %8 {strides = array<i32>} : memref<64x128xbf16, #tpu.memory_space<vmem>>, vector<64x128xbf16>,
    return
  }
  func.func @transform_0(%arg0: i32) -> (i32, i32) {
    %c0_i32 = arith.constant 0 : i32
    %c0_i32_0 = arith.constant 0 : i32
    return %arg0, %c0_i32 : i32, i32
  }
  func.func @transform_1(%arg0: i32) -> (i32, i32) {
    %c0_i32 = arith.constant 0 : i32
    %c0_i32_0 = arith.constant 0 : i32
    %c0_i32_1 = arith.constant 0 : i32
    return %c0_i32, %c0_i32_0 : i32, i32
  }
  func.func @transform_2(%arg0: i32) -> (i32, i32) {
    %c0_i32 = arith.constant 0 : i32
    %c0_i32_0 = arith.constant 0 : i32
    %c0_i32_1 = arith.constant 0 : i32
    return %c0_i32, %c0_i32_0 : i32, i32
  }
  func.func @transform_3(%arg0: i32) -> (i32, i32) {
    %c0_i32 = arith.constant 0 : i32
    %c0_i32_0 = arith.constant 0 : i32
    return %arg0, %c0_i32 : i32, i32
  }
}

module attributes {stable_mosaic.version = 11 : i64} {
  func.func @_matmul_bn_kernel(%arg0: i32, %arg1: memref<64x128xbf16, #tpu.memory_space<vmem>>, %arg2: memref<128x128xbf16, #tpu.memory_space<vmem>>, %arg3: memref<1x128xf32, #tpu.memory_space<vmem>>, %arg4: memref<64x128xbf16, #tpu.memory_space<vmem>>) attributes {dimension_semantics = [#tpu.dimension_semantics<parallel>], iteration_bounds = array<i64: 2>, scalar_prefetch = 0 : i64, scratch_operands = 0 : i64, tpu.core_type = #tpu.core_type<tc>, window_params = [{transform_indices = @transform_0, window_bounds = array<i64: 64, 128>}, {pipeline_mode = #tpu.pipeline_mode<synchronous>, transform_indices = @transform_1, window_bounds = array<i64: 128, 128>}, {pipeline_mode = #tpu.pipeline_mode<synchronous>, transform_indices = @transform_2, window_bounds = array<i64: 1, 128>}, {transform_indices = @transform_3, window_bounds = array<i64: 64, 128>}]} {
    %c0 = arith.constant 0 : index
    %c0_0 = arith.constant 0 : index
    %0 = vector.load %arg1[%c0, %c0_0] : memref<64x128xbf16, #tpu.memory_space<vmem>>, vector<64x128xbf16>
    %c0_1 = arith.constant 0 : index
    %c0_2 = arith.constant 0 : index
    %1 = vector.load %arg2[%c0_1, %c0_2] : memref<128x128xbf16, #tpu.memory_space<vmem>>, vector<128x128xbf16>
    %cst = arith.constant dense<0.000000e+00> : vector<64x128xf32>
    %2 = tpu.matmul %0, %1, %cst {dimension_numbers = #tpu.dot_dimension_numbers<[1], [0], [0], [1], [0, 0, 1, 1], [], []>} : vector<64x128xbf16>, vector<128x128xbf16>, vector<64x128xf32> -> vector<64x128xf32>
    %c0_3 = arith.constant 0 : index
    %c0_4 = arith.constant 0 : index
    %3 = vector.load %arg3[%c0_3, %c0_4] : memref<1x128xf32, #tpu.memory_space<vmem>>, vector<1x128xf32>
    %4 = vector.broadcast %3 : vector<1x128xf32> to vector<64x128xf32>
    %5 = arith.addf %2, %4 : vector<64x128xf32>
    %6 = arith.truncf %5 : vector<64x128xf32> to vector<64x128xbf16>
    %c0_5 = arith.constant 0 : index
    %c0_6 = arith.constant 0 : index
    %7 = vector.load %arg4[%c0_5, %c0_6] : memref<64x128xbf16, #tpu.memory_space<vmem>>, vector<64x128xbf16>
    tpu.vector_store %arg4[%c0_5, %c0_6], %6 {strides = array<i32>} : memref<64x128xbf16, #tpu.memory_space<vmem>>, vector<64x128xbf16>,
    return
  }
  func.func @transform_0(%arg0: i32) -> (i32, i32) {
    %c0_i32 = arith.constant 0 : i32
    %c0_i32_0 = arith.constant 0 : i32
    return %arg0, %c0_i32 : i32, i32
  }
  func.func @transform_1(%arg0: i32) -> (i32, i32) {
    %c0_i32 = arith.constant 0 : i32
    %c0_i32_0 = arith.constant 0 : i32
    %c0_i32_1 = arith.constant 0 : i32
    return %c0_i32, %c0_i32_0 : i32, i32
  }
  func.func @transform_2(%arg0: i32) -> (i32, i32) {
    %c0_i32 = arith.constant 0 : i32
    %c0_i32_0 = arith.constant 0 : i32
    %c0_i32_1 = arith.constant 0 : i32
    return %c0_i32, %c0_i32_0 : i32, i32
  }
  func.func @transform_3(%arg0: i32) -> (i32, i32) {
    %c0_i32 = arith.constant 0 : i32
    %c0_i32_0 = arith.constant 0 : i32
    return %arg0, %c0_i32 : i32, i32
  }
}

module attributes {stable_mosaic.version = 11 : i64} {
  func.func @_conv3x3_bn_kernel(%arg0: i32, %arg1: memref<1x10x10x128xbf16, #tpu.memory_space<vmem>>, %arg2: memref<1152x128xbf16, #tpu.memory_space<vmem>>, %arg3: memref<1x128xf32, #tpu.memory_space<vmem>>, %arg4: memref<64x128xbf16, #tpu.memory_space<vmem>>, %arg5: memref<64x128xf32, #tpu.memory_space<vmem>>) attributes {dimension_semantics = [#tpu.dimension_semantics<parallel>], iteration_bounds = array<i64: 2>, scalar_prefetch = 0 : i64, scratch_operands = 0 : i64, tpu.core_type = #tpu.core_type<tc>, window_params = [{transform_indices = @transform_0, window_bounds = array<i64: 1, 10, 10, 128>}, {pipeline_mode = #tpu.pipeline_mode<synchronous>, transform_indices = @transform_1, window_bounds = array<i64: 1152, 128>}, {pipeline_mode = #tpu.pipeline_mode<synchronous>, transform_indices = @transform_2, window_bounds = array<i64: 1, 128>}, {transform_indices = @transform_3, window_bounds = array<i64: 64, 128>}, {transform_indices = @transform_4, window_bounds = array<i64: 64, 128>}]} {
    %c0 = arith.constant 0 : index
    %c0_0 = arith.constant 0 : index
    %c0_1 = arith.constant 0 : index
    %c0_2 = arith.constant 0 : index
    %0 = vector.load %arg1[%c0, %c0_0, %c0_1, %c0_2] : memref<1x10x10x128xbf16, #tpu.memory_space<vmem>>, vector<1x8x8x128xbf16>
    %1 = vector.shape_cast %0 : vector<1x8x8x128xbf16> to vector<8x8x128xbf16>
    %c0_3 = arith.constant 0 : index
    %c0_4 = arith.constant 0 : index
    %c1 = arith.constant 1 : index
    %c0_5 = arith.constant 0 : index
    %2 = vector.load %arg1[%c0_3, %c0_4, %c1, %c0_5] : memref<1x10x10x128xbf16, #tpu.memory_space<vmem>>, vector<1x8x8x128xbf16>
    %3 = vector.shape_cast %2 : vector<1x8x8x128xbf16> to vector<8x8x128xbf16>
    %c0_6 = arith.constant 0 : index
    %c0_7 = arith.constant 0 : index
    %c2 = arith.constant 2 : index
    %c0_8 = arith.constant 0 : index
    %4 = vector.load %arg1[%c0_6, %c0_7, %c2, %c0_8] : memref<1x10x10x128xbf16, #tpu.memory_space<vmem>>, vector<1x8x8x128xbf16>
    %5 = vector.shape_cast %4 : vector<1x8x8x128xbf16> to vector<8x8x128xbf16>
    %c0_9 = arith.constant 0 : index
    %c1_10 = arith.constant 1 : index
    %c0_11 = arith.constant 0 : index
    %c0_12 = arith.constant 0 : index
    %6 = vector.load %arg1[%c0_9, %c1_10, %c0_11, %c0_12] : memref<1x10x10x128xbf16, #tpu.memory_space<vmem>>, vector<1x8x8x128xbf16>
    %7 = vector.shape_cast %6 : vector<1x8x8x128xbf16> to vector<8x8x128xbf16>
    %c0_13 = arith.constant 0 : index
    %c1_14 = arith.constant 1 : index
    %c1_15 = arith.constant 1 : index
    %c0_16 = arith.constant 0 : index
    %8 = vector.load %arg1[%c0_13, %c1_14, %c1_15, %c0_16] : memref<1x10x10x128xbf16, #tpu.memory_space<vmem>>, vector<1x8x8x128xbf16>
    %9 = vector.shape_cast %8 : vector<1x8x8x128xbf16> to vector<8x8x128xbf16>
    %c0_17 = arith.constant 0 : index
    %c1_18 = arith.constant 1 : index
    %c2_19 = arith.constant 2 : index
    %c0_20 = arith.constant 0 : index
    %10 = vector.load %arg1[%c0_17, %c1_18, %c2_19, %c0_20] : memref<1x10x10x128xbf16, #tpu.memory_space<vmem>>, vector<1x8x8x128xbf16>
    %11 = vector.shape_cast %10 : vector<1x8x8x128xbf16> to vector<8x8x128xbf16>
    %c0_21 = arith.constant 0 : index
    %c2_22 = arith.constant 2 : index
    %c0_23 = arith.constant 0 : index
    %c0_24 = arith.constant 0 : index
    %12 = vector.load %arg1[%c0_21, %c2_22, %c0_23, %c0_24] : memref<1x10x10x128xbf16, #tpu.memory_space<vmem>>, vector<1x8x8x128xbf16>
    %13 = vector.shape_cast %12 : vector<1x8x8x128xbf16> to vector<8x8x128xbf16>
    %c0_25 = arith.constant 0 : index
    %c2_26 = arith.constant 2 : index
    %c1_27 = arith.constant 1 : index
    %c0_28 = arith.constant 0 : index
    %14 = vector.load %arg1[%c0_25, %c2_26, %c1_27, %c0_28] : memref<1x10x10x128xbf16, #tpu.memory_space<vmem>>, vector<1x8x8x128xbf16>
    %15 = vector.shape_cast %14 : vector<1x8x8x128xbf16> to vector<8x8x128xbf16>
    %c0_29 = arith.constant 0 : index
    %c2_30 = arith.constant 2 : index
    %c2_31 = arith.constant 2 : index
    %c0_32 = arith.constant 0 : index
    %16 = vector.load %arg1[%c0_29, %c2_30, %c2_31, %c0_32] : memref<1x10x10x128xbf16, #tpu.memory_space<vmem>>, vector<1x8x8x128xbf16>
    %17 = vector.shape_cast %16 : vector<1x8x8x128xbf16> to vector<8x8x128xbf16>
    %18 = tpu.concatenate %1, %3, %5, %7, %9, %11, %13, %15, %17 in 2 : vector<8x8x128xbf16>, vector<8x8x128xbf16>, vector<8x8x128xbf16>, vector<8x8x128xbf16>, vector<8x8x128xbf16>, vector<8x8x128xbf16>, vector<8x8x128xbf16>, vector<8x8x128xbf16>, vector<8x8x128xbf16> -> vector<8x8x1152xbf16>
    %19 = vector.shape_cast %18 : vector<8x8x1152xbf16> to vector<64x1152xbf16>
    %c0_33 = arith.constant 0 : index
    %c0_34 = arith.constant 0 : index
    %20 = vector.load %arg2[%c0_33, %c0_34] : memref<1152x128xbf16, #tpu.memory_space<vmem>>, vector<1152x128xbf16>
    %cst = arith.constant dense<0.000000e+00> : vector<64x128xf32>
    %21 = tpu.matmul %19, %20, %cst {dimension_numbers = #tpu.dot_dimension_numbers<[1], [0], [0], [1], [0, 0, 1, 1], [], []>} : vector<64x1152xbf16>, vector<1152x128xbf16>, vector<64x128xf32> -> vector<64x128xf32>
    %c0_35 = arith.constant 0 : index
    %c0_36 = arith.constant 0 : index
    %22 = vector.load %arg3[%c0_35, %c0_36] : memref<1x128xf32, #tpu.memory_space<vmem>>, vector<1x128xf32>
    %23 = vector.broadcast %22 : vector<1x128xf32> to vector<64x128xf32>
    %24 = arith.addf %21, %23 : vector<64x128xf32>
    %c0_37 = arith.constant 0 : index
    %c0_38 = arith.constant 0 : index
    %25 = vector.load %arg4[%c0_37, %c0_38] : memref<64x128xbf16, #tpu.memory_space<vmem>>, vector<64x128xbf16>
    %26 = arith.extf %25 : vector<64x128xbf16> to vector<64x128xf32>
    %27 = arith.addf %24, %26 : vector<64x128xf32>
    %cst_39 = arith.constant 0.000000e+00 : f32
    %28 = vector.broadcast %cst_39 : f32 to vector<64x128xf32>
    %29 = arith.maximumf %27, %28 : vector<64x128xf32>
    %c0_40 = arith.constant 0 : index
    %c0_41 = arith.constant 0 : index
    %30 = vector.load %arg5[%c0_40, %c0_41] : memref<64x128xf32, #tpu.memory_space<vmem>>, vector<64x128xf32>
    tpu.vector_store %arg5[%c0_40, %c0_41], %29 {strides = array<i32>} : memref<64x128xf32, #tpu.memory_space<vmem>>, vector<64x128xf32>,
    return
  }
  func.func @transform_0(%arg0: i32) -> (i32, i32, i32, i32) {
    %c0_i32 = arith.constant 0 : i32
    %c0_i32_0 = arith.constant 0 : i32
    %c0_i32_1 = arith.constant 0 : i32
    %c0_i32_2 = arith.constant 0 : i32
    return %arg0, %c0_i32, %c0_i32_0, %c0_i32_1 : i32, i32, i32, i32
  }
  func.func @transform_1(%arg0: i32) -> (i32, i32) {
    %c0_i32 = arith.constant 0 : i32
    %c0_i32_0 = arith.constant 0 : i32
    %c0_i32_1 = arith.constant 0 : i32
    return %c0_i32, %c0_i32_0 : i32, i32
  }
  func.func @transform_2(%arg0: i32) -> (i32, i32) {
    %c0_i32 = arith.constant 0 : i32
    %c0_i32_0 = arith.constant 0 : i32
    %c0_i32_1 = arith.constant 0 : i32
    return %c0_i32, %c0_i32_0 : i32, i32
  }
  func.func @transform_3(%arg0: i32) -> (i32, i32) {
    %c0_i32 = arith.constant 0 : i32
    %c0_i32_0 = arith.constant 0 : i32
    return %arg0, %c0_i32 : i32, i32
  }
  func.func @transform_4(%arg0: i32) -> (i32, i32) {
    %c0_i32 = arith.constant 0 : i32
    %c0_i32_0 = arith.constant 0 : i32
    return %arg0, %c0_i32 : i32, i32
  }
}

</mosaic_0001>

<llo_original>
// kernel: basic_block_forward.4
$region0: #{basic_block_forward.4}
  #allocation0 [shape = 'u32[]', space=smem, size = 0x4, offset = 0x4, fixed_abs, tag = 'smem constant byte address 0x4 - core index']
  #allocation1 [shape = 'u32[144,128]{1,0:T(1,128)}', space=vmem, size = 0x12000, scoped, tag = 'internal scratch']
  %s0 = inlined_call_operand.vmem [shape: bf16[128,128], index: 0, kind: input, shape index: {}]
  %s1 = inlined_call_operand.vmem [shape: bf16[128,128], index: 1, kind: input, shape index: {}]
  %s2 = inlined_call_operand.vmem [shape: f32[1,128], index: 2, kind: input, shape index: {}]
  %s3 = inlined_call_operand.vmem [shape: bf16[128,128], index: 3, kind: output, shape index: {}]
  %s4 = sld [smem:[#allocation0]]
  $region45: #{basic_block_forward.4} parent=0
    _
  %s6 = ssub.s32 1, %s4
  %s7 = scalar_select 0, %s6, %s4
  loop: start=0, step=1, limit=4
  $region2: #{basic_block_forward.4} parent=0 // loop_pre_header
    _
  $region3: #{basic_block_forward.4} parent=0 // loop_header
    %s9 = sphi 0, %s13
    %p10 = scmp.ge.s32.totalorder %s9, 4
    %s19 = sphi 0, %s21
    %s22 = sphi 0, %s19
    %s23 = sphi 0, %s22
    %s39 = sphi 0, %s23
    %s43 = sphi 0, %s43
    %s45 = sphi 0, %s43
    %s46 = sphi 0, %s45
    %s60 = sphi 0, %s46
    %s64 = sphi 0, %s64
    %s66 = sphi 0, %s64
    %s67 = sphi 0, %s66
    %s81 = sphi 0, %s67
    %s87 = sphi 0, %s89
    %s90 = sphi 0, %s87
    %s91 = sphi 0, %s90
    %s107 = sphi 0, %s91
  $region4: #{basic_block_forward.4} parent=0 // loop_header_branch
    %12 = sbr.rel (%p10) target = $region8
  $region5: #{basic_block_forward.4} parent=0 // loop_body
    %s14 = ssub.s32 %s9, 1
    %s15 = ssub.s32 %s9, 2
    %s16 = sadd.s32 %s9, 1
    %s17 = ssub.s32 %s9, %s16
    %p18 = scmp.eq.s32.totalorder %s17, 0
    %s20 = sadd.s32 %s19, 1
    %s21 = scalar_select %p18, %s19, %s20
    %p24 = pneg %p18
    %p25 = scmp.eq.s32.totalorder %s9, 1
    %p26 = por %p24, %p25
    %p27 = scmp.ne.s32.totalorder %s19, %s22
    %p28 = scmp.eq.s32.totalorder %s9, 0
    %p29 = por %p27, %p28
    %p30 = scmp.ne.s32.totalorder %s19, %s22
    %p31 = scmp.eq.s32.totalorder %s14, 1
    %p32 = por %p30, %p31
    %p33 = scmp.ne.s32.totalorder %s22, %s23
    %p34 = scmp.eq.s32.totalorder %s14, 0
    %p35 = por %p33, %p34
    %p36 = scmp.ne.s32.totalorder %s22, %s23
    %p37 = scmp.eq.s32.totalorder %s15, 1
    %p38 = por %p36, %p37
    %p40 = scmp.ne.s32.totalorder %s23, %s39
    %p41 = scmp.eq.s32.totalorder %s15, 0
    %p42 = por %p40, %p41
    %s44 = sadd.s32 %s43, 1
    %p47 = scmp.eq.s32.totalorder %s9, 1
    %p48 = scmp.ne.s32.totalorder %s43, %s45
    %p49 = scmp.eq.s32.totalorder %s9, 0
    %p50 = por %p48, %p49
    %p51 = scmp.ne.s32.totalorder %s43, %s45
    %p52 = scmp.eq.s32.totalorder %s14, 1
    %p53 = por %p51, %p52
    %p54 = scmp.ne.s32.totalorder %s45, %s46
    %p55 = scmp.eq.s32.totalorder %s14, 0
    %p56 = por %p54, %p55
    %p57 = scmp.ne.s32.totalorder %s45, %s46
    %p58 = scmp.eq.s32.totalorder %s15, 1
    %p59 = por %p57, %p58
    %p61 = scmp.ne.s32.totalorder %s46, %s60
    %p62 = scmp.eq.s32.totalorder %s15, 0
    %p63 = por %p61, %p62
    %s65 = sadd.s32 %s64, 1
    %p68 = scmp.eq.s32.totalorder %s9, 1
    %p69 = scmp.ne.s32.totalorder %s64, %s66
    %p70 = scmp.eq.s32.totalorder %s9, 0
    %p71 = por %p69, %p70
    %p72 = scmp.ne.s32.totalorder %s64, %s66
    %p73 = scmp.eq.s32.totalorder %s14, 1
    %p74 = por %p72, %p73
    %p75 = scmp.ne.s32.totalorder %s66, %s67
    %p76 = scmp.eq.s32.totalorder %s14, 0
    %p77 = por %p75, %p76
    %p78 = scmp.ne.s32.totalorder %s66, %s67
    %p79 = scmp.eq.s32.totalorder %s15, 1
    %p80 = por %p78, %p79
    %p82 = scmp.ne.s32.totalorder %s67, %s81
    %p83 = scmp.eq.s32.totalorder %s15, 0
    %p84 = por %p82, %p83
    %s85 = ssub.s32 %s9, %s16
    %p86 = scmp.eq.s32.totalorder %s85, 0
    %s88 = sadd.s32 %s87, 1
    %s89 = scalar_select %p86, %s87, %s88
    %p92 = pneg %p86
    %p93 = scmp.eq.s32.totalorder %s9, 1
    %p94 = por %p92, %p93
    %p95 = scmp.ne.s32.totalorder %s87, %s90
    %p96 = scmp.eq.s32.totalorder %s9, 0
    %p97 = por %p95, %p96
    %p98 = scmp.ne.s32.totalorder %s87, %s90
    %p99 = scmp.eq.s32.totalorder %s14, 1
    %p100 = por %p98, %p99
    %p101 = scmp.ne.s32.totalorder %s90, %s91
    %p102 = scmp.eq.s32.totalorder %s14, 0
    %p103 = por %p101, %p102
    %p104 = scmp.ne.s32.totalorder %s90, %s91
    %p105 = scmp.eq.s32.totalorder %s15, 1
    %p106 = por %p104, %p105
    %p108 = scmp.ne.s32.totalorder %s91, %s107
    %p109 = scmp.eq.s32.totalorder %s15, 0
    %p110 = por %p108, %p109
    %p111 = scmp.le.s32.totalorder 1, %s9
    %p112 = scmp.lt.s32.totalorder %s9, 3
    %p113 = pnand %p111, %p112
    %p114 = pneg %p113
    // Predicated region
    $region9: #{basic_block_forward.4} parent=5 // pred_check
      _
    $region10: #{basic_block_forward.4} parent=5 // pred_check_branch
      %116 = sbr.rel (%p113) target = $region12
    $region11: #{basic_block_forward.4} parent=5 // pred_region
      %s117 = ssub.s32 %s9, 1
      // Predicated region
      $region13: #{basic_block_forward.4} parent=11 // pred_check
        %p118 = pneg %p56
      $region14: #{basic_block_forward.4} parent=11 // pred_check_branch
        %120 = sbr.rel (%p118) target = $region16
      $region15: #{basic_block_forward.4} parent=11 // pred_region
        _
      $region16: #{basic_block_forward.4} parent=11 // pred_fallthru
        _
      // Predicated region
      $region17: #{basic_block_forward.4} parent=11 // pred_check
        %p121 = pneg %p77
      $region18: #{basic_block_forward.4} parent=11 // pred_check_branch
        %123 = sbr.rel (%p121) target = $region20
      $region19: #{basic_block_forward.4} parent=11 // pred_region
        _
      $region20: #{basic_block_forward.4} parent=11 // pred_fallthru
        _
    $region12: #{basic_block_forward.4} parent=5 // pred_fallthru
      _
    %p124 = scmp.lt.s32.totalorder %s9, 2
    // Predicated region
    $region21: #{basic_block_forward.4} parent=5 // pred_check
      %p125 = pneg %p124
    $region22: #{basic_block_forward.4} parent=5 // pred_check_branch
      %127 = sbr.rel (%p125) target = $region24
    $region23: #{basic_block_forward.4} parent=5 // pred_region
      // Predicated region
      $region25: #{basic_block_forward.4} parent=23 // pred_check
        %p128 = pneg %p29
      $region26: #{basic_block_forward.4} parent=23 // pred_check_branch
        %130 = sbr.rel (%p128) target = $region28
      $region27: #{basic_block_forward.4} parent=23 // pred_region
        %s131 = smul.u32 8, %s9
        %p132 = scmp.lt.s32.totalorder %s131, 15
        %s133 = scalar_select %p132, %s131, 15
        %s134 = smul.addr %s133, 4
        %s135 = scalar_lea.vmem %s0, %s134
        %s136 = smul.u32 8, %s9
      $region28: #{basic_block_forward.4} parent=23 // pred_fallthru
        _
    $region24: #{basic_block_forward.4} parent=5 // pred_fallthru
      _
    %p137 = scmp.le.s32.totalorder 1, %s9
    %p138 = scmp.lt.s32.totalorder %s9, 3
    %p139 = pnand %p137, %p138
    %p140 = pneg %p139
    // Predicated region
    $region29: #{basic_block_forward.4} parent=5 // pred_check
      _
    $region30: #{basic_block_forward.4} parent=5 // pred_check_branch
      %142 = sbr.rel (%p139) target = $region32
    $region31: #{basic_block_forward.4} parent=5 // pred_region
      %s143 = ssub.s32 %s9, 1
      %s144 = smul.u32 8, %s14
      %p145 = scmp.lt.s32.totalorder %s144, 15
      %s146 = scalar_select %p145, %s144, 15
      %s147 = smul.addr %s146, 4
      %s148 = scalar_lea.vmem %s0, %s147
      %p149 = pneg %p35
      %p150 = pneg %p32
      %p151 = pneg %p56
      %p152 = pneg %p53
      %p153 = pneg %p77
      %p154 = pneg %p74
      %p155 = pneg %p103
      %p156 = pneg %p100
      %s157 = smul.u32 8, %s14
      %p158 = scmp.lt.s32.totalorder %s157, 15
      %s159 = scalar_select %p158, %s157, 15
      %s160 = smul.addr %s159, 4
      %s161 = scalar_lea.vmem %s3, %s160
      %s162 = smul.u32 8, %s14
      %p163 = scmp.lt.s32.totalorder %s162, 15
      %s164 = scalar_select %p163, %s162, 15
      %s165 = smul.addr %s164, 4
      %s166 = scalar_lea.vmem %s0, %s165
      %s167 = smul.u32 8, %s14
      %s168 = smul.u32 8, %s14
      %p169 = scmp.lt.s32.totalorder %s168, 15
      %s170 = scalar_select %p169, %s168, 15
      %s171 = smul.addr %s170, 4
      %s172 = scalar_lea.vmem %s3, %s171
      %s173 = smul.u32 8, %s14
      %v175 = vld [vmem:[%s166] sm:$0xf]
      %v176 = vld [vmem:[%s166 + $0x4] sm:$0xf]
      %v177 = vld [vmem:[%s166 + $0x8] sm:$0xf]
      %v178 = vld [vmem:[%s166 + $0xc] sm:$0xf]
      %v179 = vld [vmem:[%s166 + $0x10] sm:$0xf]
      %v180 = vld [vmem:[%s166 + $0x14] sm:$0xf]
      %v181 = vld [vmem:[%s166 + $0x18] sm:$0xf]
      %v182 = vld [vmem:[%s166 + $0x1c] sm:$0xf]
      %v183 = vld [vmem:[%s1] sm:$0xf]
      %v184 = vld [vmem:[%s1 + $0x4] sm:$0xf]
      %v185 = vld [vmem:[%s1 + $0x8] sm:$0xf]
      %v186 = vld [vmem:[%s1 + $0xc] sm:$0xf]
      %v187 = vld [vmem:[%s1 + $0x10] sm:$0xf]
      %v188 = vld [vmem:[%s1 + $0x14] sm:$0xf]
      %v189 = vld [vmem:[%s1 + $0x18] sm:$0xf]
      %v190 = vld [vmem:[%s1 + $0x1c] sm:$0xf]
      %v191 = vld [vmem:[%s1 + $0x20] sm:$0xf]
      %v192 = vld [vmem:[%s1 + $0x24] sm:$0xf]
      %v193 = vld [vmem:[%s1 + $0x28] sm:$0xf]
      %v194 = vld [vmem:[%s1 + $0x2c] sm:$0xf]
      %v195 = vld [vmem:[%s1 + $0x30] sm:$0xf]
      %v196 = vld [vmem:[%s1 + $0x34] sm:$0xf]
      %v197 = vld [vmem:[%s1 + $0x38] sm:$0xf]
      %v198 = vld [vmem:[%s1 + $0x3c] sm:$0xf]
      %v199 = vld [vmem:[%s2] sm:$0x1]
      %v201 = vlaneseq
      %v202 = vshrl.u32 %v201, 7
      %v203 = vsub.s32 0, %v202
      %v204 = vrot.slane %v199, %v203
      %v214 = vunpack.c.l.b16 %v175
      %v215 = vunpack.c.l.b16 %v176
      %v216 = vunpack.c.l.b16 %v177
      %v217 = vunpack.c.l.b16 %v178
      %v218 = vunpack.c.l.b16 %v179
      %v219 = vunpack.c.l.b16 %v180
      %v220 = vunpack.c.l.b16 %v181
      %v221 = vunpack.c.l.b16 %v182
      %v222 = vpack.c.b16 %v215, %v214
      %v223 = vpack.c.b16 %v217, %v216
      %v224 = vpack.c.b16 %v219, %v218
      %v225 = vpack.c.b16 %v221, %v220
      %v246 = vunpack.c.l.b16 %v183
      %v247 = vunpack.c.l.b16 %v184
      %v248 = vunpack.c.l.b16 %v185
      %v249 = vunpack.c.l.b16 %v186
      %v250 = vunpack.c.l.b16 %v187
      %v251 = vunpack.c.l.b16 %v188
      %v252 = vunpack.c.l.b16 %v189
      %v253 = vunpack.c.l.b16 %v190
      %v254 = vunpack.c.l.b16 %v191
      %v255 = vunpack.c.l.b16 %v192
      %v256 = vunpack.c.l.b16 %v193
      %v257 = vunpack.c.l.b16 %v194
      %v258 = vunpack.c.l.b16 %v195
      %v259 = vunpack.c.l.b16 %v196
      %v260 = vunpack.c.l.b16 %v197
      %v261 = vunpack.c.l.b16 %v198
      %v262 = vpack.c.b16 %v247, %v246
      %v263 = vpack.c.b16 %v249, %v248
      %v264 = vpack.c.b16 %v251, %v250
      %v265 = vpack.c.b16 %v253, %v252
      %v266 = vpack.c.b16 %v255, %v254
      %v267 = vpack.c.b16 %v257, %v256
      %v268 = vpack.c.b16 %v259, %v258
      %v269 = vpack.c.b16 %v261, %v260
      %278 = vmatprep.subr.bf16.mxu0 0
      %279 = vmatpush1.bf16.msra.mxu0 %v262
      %280 = vmatprep.subr.bf16.mxu0 0
      %281 = vmatpush1.bf16.msra.mxu0 %v263
      %282 = vmatprep.subr.bf16.mxu0 0
      %283 = vmatpush1.bf16.msra.mxu0 %v264
      %284 = vmatprep.subr.bf16.mxu0 0
      %285 = vmatpush1.bf16.msra.mxu0 %v265
      %286 = vmatprep.subr.bf16.mxu0 0
      %287 = vmatpush1.bf16.msra.mxu0 %v266
      %288 = vmatprep.subr.bf16.mxu0 0
      %289 = vmatpush1.bf16.msra.mxu0 %v267
      %290 = vmatprep.subr.bf16.mxu0 0
      %291 = vmatpush1.bf16.msra.mxu0 %v268
      %292 = vmatprep.subr.bf16.mxu0 0
      %293 = vmatpush1.bf16.msra.mxu0 %v269
      %294 = vmatprep.subr.bf16.mxu0 0
      %295 = vmatpush1.bf16.msra.mxu0 0
      %296 = vmatprep.subr.bf16.mxu0 0
      %297 = vmatpush1.bf16.msra.mxu0 0
      %298 = vmatprep.subr.bf16.mxu0 0
      %299 = vmatpush1.bf16.msra.mxu0 0
      %300 = vmatprep.subr.bf16.mxu0 0
      %301 = vmatpush1.bf16.msra.mxu0 0
      %302 = vmatprep.subr.bf16.mxu0 0
      %303 = vmatpush1.bf16.msra.mxu0 0
      %304 = vmatprep.subr.bf16.mxu0 0
      %305 = vmatpush1.bf16.msra.mxu0 0
      %306 = vmatprep.subr.bf16.mxu0 0
      %307 = vmatpush1.bf16.msra.mxu0 0
      %308 = vmatprep.subr.bf16.mxu0 0
      %309 = vmatpush1.bf16.msra.mxu0 0
      %310 = vmatprep.mubr.bf16.mxu0 0
      %311 = vmatmul.mubr.bf16.gmra.mrb[0].mxu0 %v222
      %v312 = vpop.f32.mrb[0].mxu0
      %v313 = vadd.f32 %v204, %v312
      %v314 = vpop.f32.mrb[0].mxu0
      %v315 = vpop.f32.mrb[0].mxu0
      %v316 = vadd.f32 %v204, %v315
      %v317 = vpop.f32.mrb[0].mxu0
      %318 = vmatprep.mubr.bf16.mxu0 0
      %319 = vmatmul.mubr.bf16.gmra.mrb[0].mxu0 %v223
      %v320 = vpop.f32.mrb[0].mxu0
      %v321 = vadd.f32 %v204, %v320
      %v322 = vpop.f32.mrb[0].mxu0
      %v323 = vpop.f32.mrb[0].mxu0
      %v324 = vadd.f32 %v204, %v323
      %v325 = vpop.f32.mrb[0].mxu0
      %326 = vmatprep.mubr.bf16.mxu0 0
      %327 = vmatmul.mubr.bf16.gmra.mrb[0].mxu0 %v224
      %v328 = vpop.f32.mrb[0].mxu0
      %v329 = vadd.f32 %v204, %v328
      %v330 = vpop.f32.mrb[0].mxu0
      %v331 = vpop.f32.mrb[0].mxu0
      %v332 = vadd.f32 %v204, %v331
      %v333 = vpop.f32.mrb[0].mxu0
      %334 = vmatprep.mubr.bf16.mxu0 0
      %335 = vmatmul.mubr.bf16.gmra.mrb[0].mxu0 %v225
      %v336 = vpop.f32.mrb[0].mxu0
      %v337 = vadd.f32 %v204, %v336
      %v338 = vpop.f32.mrb[0].mxu0
      %v339 = vpop.f32.mrb[0].mxu0
      %v340 = vadd.f32 %v204, %v339
      %v341 = vpop.f32.mrb[0].mxu0
      %342 = vdwg.mxu0
      %v343 = vpack.c.bf16 %v316, %v313
      %v344 = vpack.c.bf16 %v324, %v321
      %v345 = vpack.c.bf16 %v332, %v329
      %v346 = vpack.c.bf16 %v340, %v337
      %v351 = vunpack.c.l.b16 %v343
      %v352 = vunpack.c.h.b16 %v343
      %v353 = vunpack.c.l.b16 %v344
      %v354 = vunpack.c.h.b16 %v344
      %v355 = vunpack.c.l.b16 %v345
      %v356 = vunpack.c.h.b16 %v345
      %v357 = vunpack.c.l.b16 %v346
      %v358 = vunpack.c.h.b16 %v346
      %v359 = vpack.c.b16 %v351, %v351
      %v360 = vpack.c.b16 %v352, %v352
      %v361 = vpack.c.b16 %v353, %v353
      %v362 = vpack.c.b16 %v354, %v354
      %v363 = vpack.c.b16 %v355, %v355
      %v364 = vpack.c.b16 %v356, %v356
      %v365 = vpack.c.b16 %v357, %v357
      %v366 = vpack.c.b16 %v358, %v358
      %375 = vst [vmem:[%s172] sm:$0xf] %v359
      %376 = vst [vmem:[%s172 + $0x4] sm:$0xf] %v360
      %377 = vst [vmem:[%s172 + $0x8] sm:$0xf] %v361
      %378 = vst [vmem:[%s172 + $0xc] sm:$0xf] %v362
      %379 = vst [vmem:[%s172 + $0x10] sm:$0xf] %v363
      %380 = vst [vmem:[%s172 + $0x14] sm:$0xf] %v364
      %381 = vst [vmem:[%s172 + $0x18] sm:$0xf] %v365
      %382 = vst [vmem:[%s172 + $0x1c] sm:$0xf] %v366
      %s383 = smul.u32 8, %s14
      %p384 = scmp.lt.s32.totalorder %s383, 15
      %s385 = scalar_select %p384, %s383, 15
      %s386 = smul.addr %s385, 4
      %s387 = scalar_lea.vmem %s3, %s386
      // Predicated region
      $region33: #{basic_block_forward.4} parent=31 // pred_check
        %p388 = pneg %p100
      $region34: #{basic_block_forward.4} parent=31 // pred_check_branch
        %390 = sbr.rel (%p388) target = $region36
      $region35: #{basic_block_forward.4} parent=31 // pred_region
        %s391 = smul.u32 8, %s14
      $region36: #{basic_block_forward.4} parent=31 // pred_fallthru
        _
    $region32: #{basic_block_forward.4} parent=5 // pred_fallthru
      _
    %p392 = scmp.le.s32.totalorder 2, %s9
    // Predicated region
    $region37: #{basic_block_forward.4} parent=5 // pred_check
      %p393 = pneg %p392
    $region38: #{basic_block_forward.4} parent=5 // pred_check_branch
      %395 = sbr.rel (%p393) target = $region40
    $region39: #{basic_block_forward.4} parent=5 // pred_region
      %s396 = ssub.s32 %s9, 2
      // Predicated region
      $region41: #{basic_block_forward.4} parent=39 // pred_check
        %p397 = pneg %p106
      $region42: #{basic_block_forward.4} parent=39 // pred_check_branch
        %399 = sbr.rel (%p397) target = $region44
      $region43: #{basic_block_forward.4} parent=39 // pred_region
        %s400 = smul.u32 8, %s15
        %p401 = scmp.lt.s32.totalorder %s400, 15
        %s402 = scalar_select %p401, %s400, 15
        %s403 = smul.addr %s402, 4
        %s404 = scalar_lea.vmem %s3, %s403
      $region44: #{basic_block_forward.4} parent=39 // pred_fallthru
        _
    $region40: #{basic_block_forward.4} parent=5 // pred_fallthru
      _
  $region6: #{basic_block_forward.4} parent=0 // loop_footer
    %s13 = sadd.s32 1, %s9
  $region7: #{basic_block_forward.4} parent=0 // loop_footer_branch
    %8 = sbr.rel target = $region3
  $region8: #{basic_block_forward.4} parent=0 // loop_exit
    _

// kernel: basic_block_forward.3
$region0: #{basic_block_forward.3}
  #allocation0 [shape = 'u32[]', space=smem, size = 0x4, offset = 0x4, fixed_abs, tag = 'smem constant byte address 0x4 - core index']
  #allocation1 [shape = 'u32[144,128]{1,0:T(1,128)}', space=vmem, size = 0x12000, scoped, tag = 'internal scratch']
  %s0 = inlined_call_operand.vmem [shape: bf16[128,128], index: 0, kind: input, shape index: {}]
  %s1 = inlined_call_operand.vmem [shape: bf16[128,128], index: 1, kind: input, shape index: {}]
  %s2 = inlined_call_operand.vmem [shape: f32[1,128], index: 2, kind: input, shape index: {}]
  %s3 = inlined_call_operand.vmem [shape: bf16[128,128], index: 3, kind: output, shape index: {}]
  %s4 = sld [smem:[#allocation0]]
  $region45: #{basic_block_forward.3} parent=0
    _
  %s6 = ssub.s32 1, %s4
  %s7 = scalar_select 0, %s6, %s4
  loop: start=0, step=1, limit=4
  $region2: #{basic_block_forward.3} parent=0 // loop_pre_header
    _
  $region3: #{basic_block_forward.3} parent=0 // loop_header
    %s9 = sphi 0, %s13
    %p10 = scmp.ge.s32.totalorder %s9, 4
    %s19 = sphi 0, %s21
    %s22 = sphi 0, %s19
    %s23 = sphi 0, %s22
    %s39 = sphi 0, %s23
    %s43 = sphi 0, %s43
    %s45 = sphi 0, %s43
    %s46 = sphi 0, %s45
    %s60 = sphi 0, %s46
    %s64 = sphi 0, %s64
    %s66 = sphi 0, %s64
    %s67 = sphi 0, %s66
    %s81 = sphi 0, %s67
    %s87 = sphi 0, %s89
    %s90 = sphi 0, %s87
    %s91 = sphi 0, %s90
    %s107 = sphi 0, %s91
  $region4: #{basic_block_forward.3} parent=0 // loop_header_branch
    %12 = sbr.rel (%p10) target = $region8
  $region5: #{basic_block_forward.3} parent=0 // loop_body
    %s14 = ssub.s32 %s9, 1
    %s15 = ssub.s32 %s9, 2
    %s16 = sadd.s32 %s9, 1
    %s17 = ssub.s32 %s9, %s16
    %p18 = scmp.eq.s32.totalorder %s17, 0
    %s20 = sadd.s32 %s19, 1
    %s21 = scalar_select %p18, %s19, %s20
    %p24 = pneg %p18
    %p25 = scmp.eq.s32.totalorder %s9, 1
    %p26 = por %p24, %p25
    %p27 = scmp.ne.s32.totalorder %s19, %s22
    %p28 = scmp.eq.s32.totalorder %s9, 0
    %p29 = por %p27, %p28
    %p30 = scmp.ne.s32.totalorder %s19, %s22
    %p31 = scmp.eq.s32.totalorder %s14, 1
    %p32 = por %p30, %p31
    %p33 = scmp.ne.s32.totalorder %s22, %s23
    %p34 = scmp.eq.s32.totalorder %s14, 0
    %p35 = por %p33, %p34
    %p36 = scmp.ne.s32.totalorder %s22, %s23
    %p37 = scmp.eq.s32.totalorder %s15, 1
    %p38 = por %p36, %p37
    %p40 = scmp.ne.s32.totalorder %s23, %s39
    %p41 = scmp.eq.s32.totalorder %s15, 0
    %p42 = por %p40, %p41
    %s44 = sadd.s32 %s43, 1
    %p47 = scmp.eq.s32.totalorder %s9, 1
    %p48 = scmp.ne.s32.totalorder %s43, %s45
    %p49 = scmp.eq.s32.totalorder %s9, 0
    %p50 = por %p48, %p49
    %p51 = scmp.ne.s32.totalorder %s43, %s45
    %p52 = scmp.eq.s32.totalorder %s14, 1
    %p53 = por %p51, %p52
    %p54 = scmp.ne.s32.totalorder %s45, %s46
    %p55 = scmp.eq.s32.totalorder %s14, 0
    %p56 = por %p54, %p55
    %p57 = scmp.ne.s32.totalorder %s45, %s46
    %p58 = scmp.eq.s32.totalorder %s15, 1
    %p59 = por %p57, %p58
    %p61 = scmp.ne.s32.totalorder %s46, %s60
    %p62 = scmp.eq.s32.totalorder %s15, 0
    %p63 = por %p61, %p62
    %s65 = sadd.s32 %s64, 1
    %p68 = scmp.eq.s32.totalorder %s9, 1
    %p69 = scmp.ne.s32.totalorder %s64, %s66
    %p70 = scmp.eq.s32.totalorder %s9, 0
    %p71 = por %p69, %p70
    %p72 = scmp.ne.s32.totalorder %s64, %s66
    %p73 = scmp.eq.s32.totalorder %s14, 1
    %p74 = por %p72, %p73
    %p75 = scmp.ne.s32.totalorder %s66, %s67
    %p76 = scmp.eq.s32.totalorder %s14, 0
    %p77 = por %p75, %p76
    %p78 = scmp.ne.s32.totalorder %s66, %s67
    %p79 = scmp.eq.s32.totalorder %s15, 1
    %p80 = por %p78, %p79
    %p82 = scmp.ne.s32.totalorder %s67, %s81
    %p83 = scmp.eq.s32.totalorder %s15, 0
    %p84 = por %p82, %p83
    %s85 = ssub.s32 %s9, %s16
    %p86 = scmp.eq.s32.totalorder %s85, 0
    %s88 = sadd.s32 %s87, 1
    %s89 = scalar_select %p86, %s87, %s88
    %p92 = pneg %p86
    %p93 = scmp.eq.s32.totalorder %s9, 1
    %p94 = por %p92, %p93
    %p95 = scmp.ne.s32.totalorder %s87, %s90
    %p96 = scmp.eq.s32.totalorder %s9, 0
    %p97 = por %p95, %p96
    %p98 = scmp.ne.s32.totalorder %s87, %s90
    %p99 = scmp.eq.s32.totalorder %s14, 1
    %p100 = por %p98, %p99
    %p101 = scmp.ne.s32.totalorder %s90, %s91
    %p102 = scmp.eq.s32.totalorder %s14, 0
    %p103 = por %p101, %p102
    %p104 = scmp.ne.s32.totalorder %s90, %s91
    %p105 = scmp.eq.s32.totalorder %s15, 1
    %p106 = por %p104, %p105
    %p108 = scmp.ne.s32.totalorder %s91, %s107
    %p109 = scmp.eq.s32.totalorder %s15, 0
    %p110 = por %p108, %p109
    %p111 = scmp.le.s32.totalorder 1, %s9
    %p112 = scmp.lt.s32.totalorder %s9, 3
    %p113 = pnand %p111, %p112
    %p114 = pneg %p113
    // Predicated region
    $region9: #{basic_block_forward.3} parent=5 // pred_check
      _
    $region10: #{basic_block_forward.3} parent=5 // pred_check_branch
      %116 = sbr.rel (%p113) target = $region12
    $region11: #{basic_block_forward.3} parent=5 // pred_region
      %s117 = ssub.s32 %s9, 1
      // Predicated region
      $region13: #{basic_block_forward.3} parent=11 // pred_check
        %p118 = pneg %p56
      $region14: #{basic_block_forward.3} parent=11 // pred_check_branch
        %120 = sbr.rel (%p118) target = $region16
      $region15: #{basic_block_forward.3} parent=11 // pred_region
        _
      $region16: #{basic_block_forward.3} parent=11 // pred_fallthru
        _
      // Predicated region
      $region17: #{basic_block_forward.3} parent=11 // pred_check
        %p121 = pneg %p77
      $region18: #{basic_block_forward.3} parent=11 // pred_check_branch
        %123 = sbr.rel (%p121) target = $region20
      $region19: #{basic_block_forward.3} parent=11 // pred_region
        _
      $region20: #{basic_block_forward.3} parent=11 // pred_fallthru
        _
    $region12: #{basic_block_forward.3} parent=5 // pred_fallthru
      _
    %p124 = scmp.lt.s32.totalorder %s9, 2
    // Predicated region
    $region21: #{basic_block_forward.3} parent=5 // pred_check
      %p125 = pneg %p124
    $region22: #{basic_block_forward.3} parent=5 // pred_check_branch
      %127 = sbr.rel (%p125) target = $region24
    $region23: #{basic_block_forward.3} parent=5 // pred_region
      // Predicated region
      $region25: #{basic_block_forward.3} parent=23 // pred_check
        %p128 = pneg %p29
      $region26: #{basic_block_forward.3} parent=23 // pred_check_branch
        %130 = sbr.rel (%p128) target = $region28
      $region27: #{basic_block_forward.3} parent=23 // pred_region
        %s131 = smul.u32 8, %s9
        %p132 = scmp.lt.s32.totalorder %s131, 15
        %s133 = scalar_select %p132, %s131, 15
        %s134 = smul.addr %s133, 4
        %s135 = scalar_lea.vmem %s0, %s134
        %s136 = smul.u32 8, %s9
      $region28: #{basic_block_forward.3} parent=23 // pred_fallthru
        _
    $region24: #{basic_block_forward.3} parent=5 // pred_fallthru
      _
    %p137 = scmp.le.s32.totalorder 1, %s9
    %p138 = scmp.lt.s32.totalorder %s9, 3
    %p139 = pnand %p137, %p138
    %p140 = pneg %p139
    // Predicated region
    $region29: #{basic_block_forward.3} parent=5 // pred_check
      _
    $region30: #{basic_block_forward.3} parent=5 // pred_check_branch
      %142 = sbr.rel (%p139) target = $region32
    $region31: #{basic_block_forward.3} parent=5 // pred_region
      %s143 = ssub.s32 %s9, 1
      %s144 = smul.u32 8, %s14
      %p145 = scmp.lt.s32.totalorder %s144, 15
      %s146 = scalar_select %p145, %s144, 15
      %s147 = smul.addr %s146, 4
      %s148 = scalar_lea.vmem %s0, %s147
      %p149 = pneg %p35
      %p150 = pneg %p32
      %p151 = pneg %p56
      %p152 = pneg %p53
      %p153 = pneg %p77
      %p154 = pneg %p74
      %p155 = pneg %p103
      %p156 = pneg %p100
      %s157 = smul.u32 8, %s14
      %p158 = scmp.lt.s32.totalorder %s157, 15
      %s159 = scalar_select %p158, %s157, 15
      %s160 = smul.addr %s159, 4
      %s161 = scalar_lea.vmem %s3, %s160
      %s162 = smul.u32 8, %s14
      %p163 = scmp.lt.s32.totalorder %s162, 15
      %s164 = scalar_select %p163, %s162, 15
      %s165 = smul.addr %s164, 4
      %s166 = scalar_lea.vmem %s0, %s165
      %s167 = smul.u32 8, %s14
      %s168 = smul.u32 8, %s14
      %p169 = scmp.lt.s32.totalorder %s168, 15
      %s170 = scalar_select %p169, %s168, 15
      %s171 = smul.addr %s170, 4
      %s172 = scalar_lea.vmem %s3, %s171
      %s173 = smul.u32 8, %s14
      %v175 = vld [vmem:[%s166] sm:$0xf]
      %v176 = vld [vmem:[%s166 + $0x4] sm:$0xf]
      %v177 = vld [vmem:[%s166 + $0x8] sm:$0xf]
      %v178 = vld [vmem:[%s166 + $0xc] sm:$0xf]
      %v179 = vld [vmem:[%s166 + $0x10] sm:$0xf]
      %v180 = vld [vmem:[%s166 + $0x14] sm:$0xf]
      %v181 = vld [vmem:[%s166 + $0x18] sm:$0xf]
      %v182 = vld [vmem:[%s166 + $0x1c] sm:$0xf]
      %v183 = vld [vmem:[%s1] sm:$0xf]
      %v184 = vld [vmem:[%s1 + $0x4] sm:$0xf]
      %v185 = vld [vmem:[%s1 + $0x8] sm:$0xf]
      %v186 = vld [vmem:[%s1 + $0xc] sm:$0xf]
      %v187 = vld [vmem:[%s1 + $0x10] sm:$0xf]
      %v188 = vld [vmem:[%s1 + $0x14] sm:$0xf]
      %v189 = vld [vmem:[%s1 + $0x18] sm:$0xf]
      %v190 = vld [vmem:[%s1 + $0x1c] sm:$0xf]
      %v191 = vld [vmem:[%s1 + $0x20] sm:$0xf]
      %v192 = vld [vmem:[%s1 + $0x24] sm:$0xf]
      %v193 = vld [vmem:[%s1 + $0x28] sm:$0xf]
      %v194 = vld [vmem:[%s1 + $0x2c] sm:$0xf]
      %v195 = vld [vmem:[%s1 + $0x30] sm:$0xf]
      %v196 = vld [vmem:[%s1 + $0x34] sm:$0xf]
      %v197 = vld [vmem:[%s1 + $0x38] sm:$0xf]
      %v198 = vld [vmem:[%s1 + $0x3c] sm:$0xf]
      %v199 = vld [vmem:[%s2] sm:$0x1]
      %v201 = vlaneseq
      %v202 = vshrl.u32 %v201, 7
      %v203 = vsub.s32 0, %v202
      %v204 = vrot.slane %v199, %v203
      %v214 = vunpack.c.l.b16 %v175
      %v215 = vunpack.c.l.b16 %v176
      %v216 = vunpack.c.l.b16 %v177
      %v217 = vunpack.c.l.b16 %v178
      %v218 = vunpack.c.l.b16 %v179
      %v219 = vunpack.c.l.b16 %v180
      %v220 = vunpack.c.l.b16 %v181
      %v221 = vunpack.c.l.b16 %v182
      %v222 = vpack.c.b16 %v215, %v214
      %v223 = vpack.c.b16 %v217, %v216
      %v224 = vpack.c.b16 %v219, %v218
      %v225 = vpack.c.b16 %v221, %v220
      %v246 = vunpack.c.l.b16 %v183
      %v247 = vunpack.c.l.b16 %v184
      %v248 = vunpack.c.l.b16 %v185
      %v249 = vunpack.c.l.b16 %v186
      %v250 = vunpack.c.l.b16 %v187
      %v251 = vunpack.c.l.b16 %v188
      %v252 = vunpack.c.l.b16 %v189
      %v253 = vunpack.c.l.b16 %v190
      %v254 = vunpack.c.l.b16 %v191
      %v255 = vunpack.c.l.b16 %v192
      %v256 = vunpack.c.l.b16 %v193
      %v257 = vunpack.c.l.b16 %v194
      %v258 = vunpack.c.l.b16 %v195
      %v259 = vunpack.c.l.b16 %v196
      %v260 = vunpack.c.l.b16 %v197
      %v261 = vunpack.c.l.b16 %v198
      %v262 = vpack.c.b16 %v247, %v246
      %v263 = vpack.c.b16 %v249, %v248
      %v264 = vpack.c.b16 %v251, %v250
      %v265 = vpack.c.b16 %v253, %v252
      %v266 = vpack.c.b16 %v255, %v254
      %v267 = vpack.c.b16 %v257, %v256
      %v268 = vpack.c.b16 %v259, %v258
      %v269 = vpack.c.b16 %v261, %v260
      %278 = vmatprep.subr.bf16.mxu0 0
      %279 = vmatpush1.bf16.msra.mxu0 %v262
      %280 = vmatprep.subr.bf16.mxu0 0
      %281 = vmatpush1.bf16.msra.mxu0 %v263
      %282 = vmatprep.subr.bf16.mxu0 0
      %283 = vmatpush1.bf16.msra.mxu0 %v264
      %284 = vmatprep.subr.bf16.mxu0 0
      %285 = vmatpush1.bf16.msra.mxu0 %v265
      %286 = vmatprep.subr.bf16.mxu0 0
      %287 = vmatpush1.bf16.msra.mxu0 %v266
      %288 = vmatprep.subr.bf16.mxu0 0
      %289 = vmatpush1.bf16.msra.mxu0 %v267
      %290 = vmatprep.subr.bf16.mxu0 0
      %291 = vmatpush1.bf16.msra.mxu0 %v268
      %292 = vmatprep.subr.bf16.mxu0 0
      %293 = vmatpush1.bf16.msra.mxu0 %v269
      %294 = vmatprep.subr.bf16.mxu0 0
      %295 = vmatpush1.bf16.msra.mxu0 0
      %296 = vmatprep.subr.bf16.mxu0 0
      %297 = vmatpush1.bf16.msra.mxu0 0
      %298 = vmatprep.subr.bf16.mxu0 0
      %299 = vmatpush1.bf16.msra.mxu0 0
      %300 = vmatprep.subr.bf16.mxu0 0
      %301 = vmatpush1.bf16.msra.mxu0 0
      %302 = vmatprep.subr.bf16.mxu0 0
      %303 = vmatpush1.bf16.msra.mxu0 0
      %304 = vmatprep.subr.bf16.mxu0 0
      %305 = vmatpush1.bf16.msra.mxu0 0
      %306 = vmatprep.subr.bf16.mxu0 0
      %307 = vmatpush1.bf16.msra.mxu0 0
      %308 = vmatprep.subr.bf16.mxu0 0
      %309 = vmatpush1.bf16.msra.mxu0 0
      %310 = vmatprep.mubr.bf16.mxu0 0
      %311 = vmatmul.mubr.bf16.gmra.mrb[0].mxu0 %v222
      %v312 = vpop.f32.mrb[0].mxu0
      %v313 = vadd.f32 %v204, %v312
      %v314 = vpop.f32.mrb[0].mxu0
      %v315 = vpop.f32.mrb[0].mxu0
      %v316 = vadd.f32 %v204, %v315
      %v317 = vpop.f32.mrb[0].mxu0
      %318 = vmatprep.mubr.bf16.mxu0 0
      %319 = vmatmul.mubr.bf16.gmra.mrb[0].mxu0 %v223
      %v320 = vpop.f32.mrb[0].mxu0
      %v321 = vadd.f32 %v204, %v320
      %v322 = vpop.f32.mrb[0].mxu0
      %v323 = vpop.f32.mrb[0].mxu0
      %v324 = vadd.f32 %v204, %v323
      %v325 = vpop.f32.mrb[0].mxu0
      %326 = vmatprep.mubr.bf16.mxu0 0
      %327 = vmatmul.mubr.bf16.gmra.mrb[0].mxu0 %v224
      %v328 = vpop.f32.mrb[0].mxu0
      %v329 = vadd.f32 %v204, %v328
      %v330 = vpop.f32.mrb[0].mxu0
      %v331 = vpop.f32.mrb[0].mxu0
      %v332 = vadd.f32 %v204, %v331
      %v333 = vpop.f32.mrb[0].mxu0
      %334 = vmatprep.mubr.bf16.mxu0 0
      %335 = vmatmul.mubr.bf16.gmra.mrb[0].mxu0 %v225
      %v336 = vpop.f32.mrb[0].mxu0
      %v337 = vadd.f32 %v204, %v336
      %v338 = vpop.f32.mrb[0].mxu0
      %v339 = vpop.f32.mrb[0].mxu0
      %v340 = vadd.f32 %v204, %v339
      %v341 = vpop.f32.mrb[0].mxu0
      %342 = vdwg.mxu0
      %v343 = vmax.f32 %v313, 0.0
      %v344 = vmax.f32 %v316, 0.0
      %v345 = vmax.f32 %v321, 0.0
      %v346 = vmax.f32 %v324, 0.0
      %v347 = vmax.f32 %v329, 0.0
      %v348 = vmax.f32 %v332, 0.0
      %v349 = vmax.f32 %v337, 0.0
      %v350 = vmax.f32 %v340, 0.0
      %v351 = vpack.c.bf16 %v344, %v343
      %v352 = vpack.c.bf16 %v346, %v345
      %v353 = vpack.c.bf16 %v348, %v347
      %v354 = vpack.c.bf16 %v350, %v349
      %v359 = vunpack.c.l.b16 %v351
      %v360 = vunpack.c.h.b16 %v351
      %v361 = vunpack.c.l.b16 %v352
      %v362 = vunpack.c.h.b16 %v352
      %v363 = vunpack.c.l.b16 %v353
      %v364 = vunpack.c.h.b16 %v353
      %v365 = vunpack.c.l.b16 %v354
      %v366 = vunpack.c.h.b16 %v354
      %v367 = vpack.c.b16 %v359, %v359
      %v368 = vpack.c.b16 %v360, %v360
      %v369 = vpack.c.b16 %v361, %v361
      %v370 = vpack.c.b16 %v362, %v362
      %v371 = vpack.c.b16 %v363, %v363
      %v372 = vpack.c.b16 %v364, %v364
      %v373 = vpack.c.b16 %v365, %v365
      %v374 = vpack.c.b16 %v366, %v366
      %383 = vst [vmem:[%s172] sm:$0xf] %v367
      %384 = vst [vmem:[%s172 + $0x4] sm:$0xf] %v368
      %385 = vst [vmem:[%s172 + $0x8] sm:$0xf] %v369
      %386 = vst [vmem:[%s172 + $0xc] sm:$0xf] %v370
      %387 = vst [vmem:[%s172 + $0x10] sm:$0xf] %v371
      %388 = vst [vmem:[%s172 + $0x14] sm:$0xf] %v372
      %389 = vst [vmem:[%s172 + $0x18] sm:$0xf] %v373
      %390 = vst [vmem:[%s172 + $0x1c] sm:$0xf] %v374
      %s391 = smul.u32 8, %s14
      %p392 = scmp.lt.s32.totalorder %s391, 15
      %s393 = scalar_select %p392, %s391, 15
      %s394 = smul.addr %s393, 4
      %s395 = scalar_lea.vmem %s3, %s394
      // Predicated region
      $region33: #{basic_block_forward.3} parent=31 // pred_check
        %p396 = pneg %p100
      $region34: #{basic_block_forward.3} parent=31 // pred_check_branch
        %398 = sbr.rel (%p396) target = $region36
      $region35: #{basic_block_forward.3} parent=31 // pred_region
        %s399 = smul.u32 8, %s14
      $region36: #{basic_block_forward.3} parent=31 // pred_fallthru
        _
    $region32: #{basic_block_forward.3} parent=5 // pred_fallthru
      _
    %p400 = scmp.le.s32.totalorder 2, %s9
    // Predicated region
    $region37: #{basic_block_forward.3} parent=5 // pred_check
      %p401 = pneg %p400
    $region38: #{basic_block_forward.3} parent=5 // pred_check_branch
      %403 = sbr.rel (%p401) target = $region40
    $region39: #{basic_block_forward.3} parent=5 // pred_region
      %s404 = ssub.s32 %s9, 2
      // Predicated region
      $region41: #{basic_block_forward.3} parent=39 // pred_check
        %p405 = pneg %p106
      $region42: #{basic_block_forward.3} parent=39 // pred_check_branch
        %407 = sbr.rel (%p405) target = $region44
      $region43: #{basic_block_forward.3} parent=39 // pred_region
        %s408 = smul.u32 8, %s15
        %p409 = scmp.lt.s32.totalorder %s408, 15
        %s410 = scalar_select %p409, %s408, 15
        %s411 = smul.addr %s410, 4
        %s412 = scalar_lea.vmem %s3, %s411
      $region44: #{basic_block_forward.3} parent=39 // pred_fallthru
        _
    $region40: #{basic_block_forward.3} parent=5 // pred_fallthru
      _
  $region6: #{basic_block_forward.3} parent=0 // loop_footer
    %s13 = sadd.s32 1, %s9
  $region7: #{basic_block_forward.3} parent=0 // loop_footer_branch
    %8 = sbr.rel target = $region3
  $region8: #{basic_block_forward.3} parent=0 // loop_exit
    _

// kernel: basic_block_forward.5
$region0: #{basic_block_forward.5}
  #allocation0 [shape = 'u32[]', space=smem, size = 0x4, offset = 0x4, fixed_abs, tag = 'smem constant byte address 0x4 - core index']
  #allocation1 [shape = 'u32[144,128]{1,0:T(1,128)}', space=vmem, size = 0x12000, scoped, tag = 'internal scratch']
  %s0 = inlined_call_operand.vmem [shape: bf16[2,10,10,128], index: 0, kind: input, shape index: {}]
  %s1 = inlined_call_operand.vmem [shape: bf16[1152,128], index: 1, kind: input, shape index: {}]
  %s2 = inlined_call_operand.vmem [shape: f32[1,128], index: 2, kind: input, shape index: {}]
  %s3 = inlined_call_operand.vmem [shape: bf16[128,128], index: 3, kind: input, shape index: {}]
  %s4 = inlined_call_operand.vmem [shape: f32[128,128], index: 4, kind: output, shape index: {}]
  %s5 = sld [smem:[#allocation0]]
  $region49: #{basic_block_forward.5} parent=0
    _
  %s7 = ssub.s32 1, %s5
  %s8 = scalar_select 0, %s7, %s5
  loop: start=0, step=1, limit=4
  $region2: #{basic_block_forward.5} parent=0 // loop_pre_header
    _
  $region3: #{basic_block_forward.5} parent=0 // loop_header
    %s10 = sphi 0, %s14
    %p11 = scmp.ge.s32.totalorder %s10, 4
    %s20 = sphi 0, %s22
    %s23 = sphi 0, %s20
    %s24 = sphi 0, %s23
    %s40 = sphi 0, %s24
    %s44 = sphi 0, %s44
    %s46 = sphi 0, %s44
    %s47 = sphi 0, %s46
    %s61 = sphi 0, %s47
    %s65 = sphi 0, %s65
    %s67 = sphi 0, %s65
    %s68 = sphi 0, %s67
    %s82 = sphi 0, %s68
    %s88 = sphi 0, %s90
    %s91 = sphi 0, %s88
    %s92 = sphi 0, %s91
    %s108 = sphi 0, %s92
    %s114 = sphi 0, %s116
    %s117 = sphi 0, %s114
    %s118 = sphi 0, %s117
    %s134 = sphi 0, %s118
  $region4: #{basic_block_forward.5} parent=0 // loop_header_branch
    %13 = sbr.rel (%p11) target = $region8
  $region5: #{basic_block_forward.5} parent=0 // loop_body
    %s15 = ssub.s32 %s10, 1
    %s16 = ssub.s32 %s10, 2
    %s17 = sadd.s32 %s10, 1
    %s18 = ssub.s32 %s10, %s17
    %p19 = scmp.eq.s32.totalorder %s18, 0
    %s21 = sadd.s32 %s20, 1
    %s22 = scalar_select %p19, %s20, %s21
    %p25 = pneg %p19
    %p26 = scmp.eq.s32.totalorder %s10, 1
    %p27 = por %p25, %p26
    %p28 = scmp.ne.s32.totalorder %s20, %s23
    %p29 = scmp.eq.s32.totalorder %s10, 0
    %p30 = por %p28, %p29
    %p31 = scmp.ne.s32.totalorder %s20, %s23
    %p32 = scmp.eq.s32.totalorder %s15, 1
    %p33 = por %p31, %p32
    %p34 = scmp.ne.s32.totalorder %s23, %s24
    %p35 = scmp.eq.s32.totalorder %s15, 0
    %p36 = por %p34, %p35
    %p37 = scmp.ne.s32.totalorder %s23, %s24
    %p38 = scmp.eq.s32.totalorder %s16, 1
    %p39 = por %p37, %p38
    %p41 = scmp.ne.s32.totalorder %s24, %s40
    %p42 = scmp.eq.s32.totalorder %s16, 0
    %p43 = por %p41, %p42
    %s45 = sadd.s32 %s44, 1
    %p48 = scmp.eq.s32.totalorder %s10, 1
    %p49 = scmp.ne.s32.totalorder %s44, %s46
    %p50 = scmp.eq.s32.totalorder %s10, 0
    %p51 = por %p49, %p50
    %p52 = scmp.ne.s32.totalorder %s44, %s46
    %p53 = scmp.eq.s32.totalorder %s15, 1
    %p54 = por %p52, %p53
    %p55 = scmp.ne.s32.totalorder %s46, %s47
    %p56 = scmp.eq.s32.totalorder %s15, 0
    %p57 = por %p55, %p56
    %p58 = scmp.ne.s32.totalorder %s46, %s47
    %p59 = scmp.eq.s32.totalorder %s16, 1
    %p60 = por %p58, %p59
    %p62 = scmp.ne.s32.totalorder %s47, %s61
    %p63 = scmp.eq.s32.totalorder %s16, 0
    %p64 = por %p62, %p63
    %s66 = sadd.s32 %s65, 1
    %p69 = scmp.eq.s32.totalorder %s10, 1
    %p70 = scmp.ne.s32.totalorder %s65, %s67
    %p71 = scmp.eq.s32.totalorder %s10, 0
    %p72 = por %p70, %p71
    %p73 = scmp.ne.s32.totalorder %s65, %s67
    %p74 = scmp.eq.s32.totalorder %s15, 1
    %p75 = por %p73, %p74
    %p76 = scmp.ne.s32.totalorder %s67, %s68
    %p77 = scmp.eq.s32.totalorder %s15, 0
    %p78 = por %p76, %p77
    %p79 = scmp.ne.s32.totalorder %s67, %s68
    %p80 = scmp.eq.s32.totalorder %s16, 1
    %p81 = por %p79, %p80
    %p83 = scmp.ne.s32.totalorder %s68, %s82
    %p84 = scmp.eq.s32.totalorder %s16, 0
    %p85 = por %p83, %p84
    %s86 = ssub.s32 %s10, %s17
    %p87 = scmp.eq.s32.totalorder %s86, 0
    %s89 = sadd.s32 %s88, 1
    %s90 = scalar_select %p87, %s88, %s89
    %p93 = pneg %p87
    %p94 = scmp.eq.s32.totalorder %s10, 1
    %p95 = por %p93, %p94
    %p96 = scmp.ne.s32.totalorder %s88, %s91
    %p97 = scmp.eq.s32.totalorder %s10, 0
    %p98 = por %p96, %p97
    %p99 = scmp.ne.s32.totalorder %s88, %s91
    %p100 = scmp.eq.s32.totalorder %s15, 1
    %p101 = por %p99, %p100
    %p102 = scmp.ne.s32.totalorder %s91, %s92
    %p103 = scmp.eq.s32.totalorder %s15, 0
    %p104 = por %p102, %p103
    %p105 = scmp.ne.s32.totalorder %s91, %s92
    %p106 = scmp.eq.s32.totalorder %s16, 1
    %p107 = por %p105, %p106
    %p109 = scmp.ne.s32.totalorder %s92, %s108
    %p110 = scmp.eq.s32.totalorder %s16, 0
    %p111 = por %p109, %p110
    %s112 = ssub.s32 %s10, %s17
    %p113 = scmp.eq.s32.totalorder %s112, 0
    %s115 = sadd.s32 %s114, 1
    %s116 = scalar_select %p113, %s114, %s115
    %p119 = pneg %p113
    %p120 = scmp.eq.s32.totalorder %s10, 1
    %p121 = por %p119, %p120
    %p122 = scmp.ne.s32.totalorder %s114, %s117
    %p123 = scmp.eq.s32.totalorder %s10, 0
    %p124 = por %p122, %p123
    %p125 = scmp.ne.s32.totalorder %s114, %s117
    %p126 = scmp.eq.s32.totalorder %s15, 1
    %p127 = por %p125, %p126
    %p128 = scmp.ne.s32.totalorder %s117, %s118
    %p129 = scmp.eq.s32.totalorder %s15, 0
    %p130 = por %p128, %p129
    %p131 = scmp.ne.s32.totalorder %s117, %s118
    %p132 = scmp.eq.s32.totalorder %s16, 1
    %p133 = por %p131, %p132
    %p135 = scmp.ne.s32.totalorder %s118, %s134
    %p136 = scmp.eq.s32.totalorder %s16, 0
    %p137 = por %p135, %p136
    %p138 = scmp.le.s32.totalorder 1, %s10
    %p139 = scmp.lt.s32.totalorder %s10, 3
    %p140 = pnand %p138, %p139
    %p141 = pneg %p140
    // Predicated region
    $region9: #{basic_block_forward.5} parent=5 // pred_check
      _
    $region10: #{basic_block_forward.5} parent=5 // pred_check_branch
      %143 = sbr.rel (%p140) target = $region12
    $region11: #{basic_block_forward.5} parent=5 // pred_region
      %s144 = ssub.s32 %s10, 1
      // Predicated region
      $region13: #{basic_block_forward.5} parent=11 // pred_check
        %p145 = pneg %p57
      $region14: #{basic_block_forward.5} parent=11 // pred_check_branch
        %147 = sbr.rel (%p145) target = $region16
      $region15: #{basic_block_forward.5} parent=11 // pred_region
        _
      $region16: #{basic_block_forward.5} parent=11 // pred_fallthru
        _
      // Predicated region
      $region17: #{basic_block_forward.5} parent=11 // pred_check
        %p148 = pneg %p78
      $region18: #{basic_block_forward.5} parent=11 // pred_check_branch
        %150 = sbr.rel (%p148) target = $region20
      $region19: #{basic_block_forward.5} parent=11 // pred_region
        _
      $region20: #{basic_block_forward.5} parent=11 // pred_fallthru
        _
    $region12: #{basic_block_forward.5} parent=5 // pred_fallthru
      _
    %p151 = scmp.lt.s32.totalorder %s10, 2
    // Predicated region
    $region21: #{basic_block_forward.5} parent=5 // pred_check
      %p152 = pneg %p151
    $region22: #{basic_block_forward.5} parent=5 // pred_check_branch
      %154 = sbr.rel (%p152) target = $region24
    $region23: #{basic_block_forward.5} parent=5 // pred_region
      // Predicated region
      $region25: #{basic_block_forward.5} parent=23 // pred_check
        %p155 = pneg %p30
      $region26: #{basic_block_forward.5} parent=23 // pred_check_branch
        %157 = sbr.rel (%p155) target = $region28
      $region27: #{basic_block_forward.5} parent=23 // pred_region
        %p158 = scmp.lt.s32.totalorder %s10, 1
        %s159 = scalar_select %p158, %s10, 1
        %s160 = smul.addr %s159, 20
        %s161 = smul.addr %s160, 4
        %s162 = scalar_lea.vmem %s0, %s161
      $region28: #{basic_block_forward.5} parent=23 // pred_fallthru
        _
      // Predicated region
      $region29: #{basic_block_forward.5} parent=23 // pred_check
        %p163 = pneg %p98
      $region30: #{basic_block_forward.5} parent=23 // pred_check_branch
        %165 = sbr.rel (%p163) target = $region32
      $region31: #{basic_block_forward.5} parent=23 // pred_region
        %s166 = smul.u32 8, %s10
        %p167 = scmp.lt.s32.totalorder %s166, 15
        %s168 = scalar_select %p167, %s166, 15
        %s169 = smul.addr %s168, 4
        %s170 = scalar_lea.vmem %s3, %s169
        %s171 = smul.u32 8, %s10
      $region32: #{basic_block_forward.5} parent=23 // pred_fallthru
        _
    $region24: #{basic_block_forward.5} parent=5 // pred_fallthru
      _
    %p172 = scmp.le.s32.totalorder 1, %s10
    %p173 = scmp.lt.s32.totalorder %s10, 3
    %p174 = pnand %p172, %p173
    %p175 = pneg %p174
    // Predicated region
    $region33: #{basic_block_forward.5} parent=5 // pred_check
      _
    $region34: #{basic_block_forward.5} parent=5 // pred_check_branch
      %177 = sbr.rel (%p174) target = $region36
    $region35: #{basic_block_forward.5} parent=5 // pred_region
      %s178 = ssub.s32 %s10, 1
      %p179 = scmp.lt.s32.totalorder %s15, 1
      %s180 = scalar_select %p179, %s15, 1
      %s181 = smul.addr %s180, 20
      %s182 = smul.addr %s181, 4
      %s183 = scalar_lea.vmem %s0, %s182
      %p184 = pneg %p36
      %p185 = pneg %p33
      %p186 = pneg %p57
      %p187 = pneg %p54
      %p188 = pneg %p78
      %p189 = pneg %p75
      %s190 = smul.u32 8, %s15
      %p191 = scmp.lt.s32.totalorder %s190, 15
      %s192 = scalar_select %p191, %s190, 15
      %s193 = smul.addr %s192, 4
      %s194 = scalar_lea.vmem %s3, %s193
      %p195 = pneg %p104
      %p196 = pneg %p101
      %p197 = pneg %p130
      %p198 = pneg %p127
      %s199 = smul.u32 8, %s15
      %p200 = scmp.lt.s32.totalorder %s199, 15
      %s201 = scalar_select %p200, %s199, 15
      %s202 = smul.addr %s201, 8
      %s203 = scalar_lea.vmem %s4, %s202
      %p204 = scmp.lt.s32.totalorder %s15, 1
      %s205 = scalar_select %p204, %s15, 1
      %s206 = smul.addr %s205, 20
      %s207 = smul.addr %s206, 4
      %s208 = scalar_lea.vmem %s0, %s207
      %s209 = smul.u32 8, %s15
      %p210 = scmp.lt.s32.totalorder %s209, 15
      %s211 = scalar_select %p210, %s209, 15
      %s212 = smul.addr %s211, 4
      %s213 = scalar_lea.vmem %s3, %s212
      %s214 = smul.u32 8, %s15
      %s215 = smul.u32 8, %s15
      %p216 = scmp.lt.s32.totalorder %s215, 15
      %s217 = scalar_select %p216, %s215, 15
      %s218 = smul.addr %s217, 8
      %s219 = scalar_lea.vmem %s4, %s218
      %s220 = smul.u32 8, %s15
      %v222 = vld [vmem:[%s208] sm:$0xf]
      %v223 = vld [vmem:[%s208 + $0x8] sm:$0xf]
      %v224 = vld [vmem:[%s208 + $0x10] sm:$0xf]
      %v225 = vld [vmem:[%s208 + $0x18] sm:$0xf]
      %v226 = vld [vmem:[%s208 + $0x20] sm:$0xf]
      %v227 = vld [vmem:[%s208 + $0x28] sm:$0xf]
      %v228 = vld [vmem:[%s208 + $0x30] sm:$0xf]
      %v229 = vld [vmem:[%s208 + $0x38] sm:$0xf]
      %v230 = vld [vmem:[%s208 + $0x4] sm:$0x1]
      %v231 = vld [vmem:[%s208 + $0xc] sm:$0x1]
      %v232 = vld [vmem:[%s208 + $0x14] sm:$0x1]
      %v233 = vld [vmem:[%s208 + $0x1c] sm:$0x1]
      %v234 = vld [vmem:[%s208 + $0x24] sm:$0x1]
      %v235 = vld [vmem:[%s208 + $0x2c] sm:$0x1]
      %v236 = vld [vmem:[%s208 + $0x34] sm:$0x1]
      %v237 = vld [vmem:[%s208 + $0x3c] sm:$0x1]
      %v238 = vld [vmem:[%s208] sm:$0xe]
      %v239 = vld [vmem:[%s208 + $0x8] sm:$0xe]
      %v240 = vld [vmem:[%s208 + $0x10] sm:$0xe]
      %v241 = vld [vmem:[%s208 + $0x18] sm:$0xe]
      %v242 = vld [vmem:[%s208 + $0x20] sm:$0xe]
      %v243 = vld [vmem:[%s208 + $0x28] sm:$0xe]
      %v244 = vld [vmem:[%s208 + $0x30] sm:$0xe]
      %v245 = vld [vmem:[%s208 + $0x38] sm:$0xe]
      %s246 = scalar_lea.vmem %s208, 8
      %v247 = vld [vmem:[%s246] sm:$0xf]
      %v248 = vld [vmem:[%s246 + $0x8] sm:$0xf]
      %v249 = vld [vmem:[%s246 + $0x10] sm:$0xf]
      %v250 = vld [vmem:[%s246 + $0x18] sm:$0xf]
      %v251 = vld [vmem:[%s246 + $0x20] sm:$0xf]
      %v252 = vld [vmem:[%s246 + $0x28] sm:$0xf]
      %v253 = vld [vmem:[%s246 + $0x30] sm:$0xf]
      %v254 = vld [vmem:[%s246 + $0x38] sm:$0xf]
      %v255 = vld [vmem:[%s246 + $0x4] sm:$0x1]
      %v256 = vld [vmem:[%s246 + $0xc] sm:$0x1]
      %v257 = vld [vmem:[%s246 + $0x14] sm:$0x1]
      %v258 = vld [vmem:[%s246 + $0x1c] sm:$0x1]
      %v259 = vld [vmem:[%s246 + $0x24] sm:$0x1]
      %v260 = vld [vmem:[%s246 + $0x2c] sm:$0x1]
      %v261 = vld [vmem:[%s246 + $0x34] sm:$0x1]
      %v262 = vld [vmem:[%s246 + $0x3c] sm:$0x1]
      %v263 = vld [vmem:[%s246] sm:$0xe]
      %v264 = vld [vmem:[%s246 + $0x8] sm:$0xe]
      %v265 = vld [vmem:[%s246 + $0x10] sm:$0xe]
      %v266 = vld [vmem:[%s246 + $0x18] sm:$0xe]
      %v267 = vld [vmem:[%s246 + $0x20] sm:$0xe]
      %v268 = vld [vmem:[%s246 + $0x28] sm:$0xe]
      %v269 = vld [vmem:[%s246 + $0x30] sm:$0xe]
      %v270 = vld [vmem:[%s246 + $0x38] sm:$0xe]
      %s271 = scalar_lea.vmem %s208, 16
      %v272 = vld [vmem:[%s271] sm:$0xf]
      %v273 = vld [vmem:[%s271 + $0x8] sm:$0xf]
      %v274 = vld [vmem:[%s271 + $0x10] sm:$0xf]
      %v275 = vld [vmem:[%s271 + $0x18] sm:$0xf]
      %v276 = vld [vmem:[%s271 + $0x20] sm:$0xf]
      %v277 = vld [vmem:[%s271 + $0x28] sm:$0xf]
      %v278 = vld [vmem:[%s271 + $0x30] sm:$0xf]
      %v279 = vld [vmem:[%s271 + $0x38] sm:$0xf]
      %v280 = vld [vmem:[%s271 + $0x4] sm:$0x1]
      %v281 = vld [vmem:[%s271 + $0xc] sm:$0x1]
      %v282 = vld [vmem:[%s271 + $0x14] sm:$0x1]
      %v283 = vld [vmem:[%s271 + $0x1c] sm:$0x1]
      %v284 = vld [vmem:[%s271 + $0x24] sm:$0x1]
      %v285 = vld [vmem:[%s271 + $0x2c] sm:$0x1]
      %v286 = vld [vmem:[%s271 + $0x34] sm:$0x1]
      %v287 = vld [vmem:[%s271 + $0x3c] sm:$0x1]
      %v288 = vld [vmem:[%s271] sm:$0xe]
      %v289 = vld [vmem:[%s271 + $0x8] sm:$0xe]
      %v290 = vld [vmem:[%s271 + $0x10] sm:$0xe]
      %v291 = vld [vmem:[%s271 + $0x18] sm:$0xe]
      %v292 = vld [vmem:[%s271 + $0x20] sm:$0xe]
      %v293 = vld [vmem:[%s271 + $0x28] sm:$0xe]
      %v294 = vld [vmem:[%s271 + $0x30] sm:$0xe]
      %v295 = vld [vmem:[%s271 + $0x38] sm:$0xe]
      %v312 = vunpack.c.l.b16 %v222
      %v313 = vunpack.c.l.b16 %v230
      %v314 = vunpack.c.l.b16 %v223
      %v315 = vunpack.c.l.b16 %v231
      %v316 = vunpack.c.l.b16 %v224
      %v317 = vunpack.c.l.b16 %v232
      %v318 = vunpack.c.l.b16 %v225
      %v319 = vunpack.c.l.b16 %v233
      %v320 = vunpack.c.l.b16 %v226
      %v321 = vunpack.c.l.b16 %v234
      %v322 = vunpack.c.l.b16 %v227
      %v323 = vunpack.c.l.b16 %v235
      %v324 = vunpack.c.l.b16 %v228
      %v325 = vunpack.c.l.b16 %v236
      %v326 = vunpack.c.l.b16 %v229
      %v327 = vunpack.c.l.b16 %v237
      %v328 = vpack.c.b16 %v313, %v312
      %v329 = vpack.c.b16 %v315, %v314
      %v330 = vpack.c.b16 %v317, %v316
      %v331 = vpack.c.b16 %v319, %v318
      %v332 = vpack.c.b16 %v321, %v320
      %v333 = vpack.c.b16 %v323, %v322
      %v334 = vpack.c.b16 %v325, %v324
      %v335 = vpack.c.b16 %v327, %v326
      %v337 = vshrl.u32 %v328, 16
      %v339 = vshll.u32 %v328, 16
      %v341 = vrot.slane %v339, 1
      %v342 = vor.u32 %v337, %v341
      %v344 = vshrl.u32 %v329, 16
      %v346 = vshll.u32 %v329, 16
      %v348 = vrot.slane %v346, 1
      %v349 = vor.u32 %v344, %v348
      %v351 = vshrl.u32 %v330, 16
      %v353 = vshll.u32 %v330, 16
      %v355 = vrot.slane %v353, 1
      %v356 = vor.u32 %v351, %v355
      %v358 = vshrl.u32 %v331, 16
      %v360 = vshll.u32 %v331, 16
      %v362 = vrot.slane %v360, 1
      %v363 = vor.u32 %v358, %v362
      %v365 = vshrl.u32 %v332, 16
      %v367 = vshll.u32 %v332, 16
      %v369 = vrot.slane %v367, 1
      %v370 = vor.u32 %v365, %v369
      %v372 = vshrl.u32 %v333, 16
      %v374 = vshll.u32 %v333, 16
      %v376 = vrot.slane %v374, 1
      %v377 = vor.u32 %v372, %v376
      %v379 = vshrl.u32 %v334, 16
      %v381 = vshll.u32 %v334, 16
      %v383 = vrot.slane %v381, 1
      %v384 = vor.u32 %v379, %v383
      %v386 = vshrl.u32 %v335, 16
      %v388 = vshll.u32 %v335, 16
      %v390 = vrot.slane %v388, 1
      %v391 = vor.u32 %v386, %v390
      %v400 = vunpack.c.l.b16 %v238
      %v401 = vunpack.c.l.b16 %v239
      %v402 = vunpack.c.l.b16 %v240
      %v403 = vunpack.c.l.b16 %v241
      %v404 = vunpack.c.l.b16 %v242
      %v405 = vunpack.c.l.b16 %v243
      %v406 = vunpack.c.l.b16 %v244
      %v407 = vunpack.c.l.b16 %v245
      %v408 = vpack.c.b16 %v313, %v400
      %v409 = vpack.c.b16 %v315, %v401
      %v410 = vpack.c.b16 %v317, %v402
      %v411 = vpack.c.b16 %v319, %v403
      %v412 = vpack.c.b16 %v321, %v404
      %v413 = vpack.c.b16 %v323, %v405
      %v414 = vpack.c.b16 %v325, %v406
      %v415 = vpack.c.b16 %v327, %v407
      %v416 = vrot.slane %v408, 1
      %v417 = vrot.slane %v409, 1
      %v418 = vrot.slane %v410, 1
      %v419 = vrot.slane %v411, 1
      %v420 = vrot.slane %v412, 1
      %v421 = vrot.slane %v413, 1
      %v422 = vrot.slane %v414, 1
      %v423 = vrot.slane %v415, 1
      %v440 = vunpack.c.l.b16 %v247
      %v441 = vunpack.c.l.b16 %v255
      %v442 = vunpack.c.l.b16 %v248
      %v443 = vunpack.c.l.b16 %v256
      %v444 = vunpack.c.l.b16 %v249
      %v445 = vunpack.c.l.b16 %v257
      %v446 = vunpack.c.l.b16 %v250
      %v447 = vunpack.c.l.b16 %v258
      %v448 = vunpack.c.l.b16 %v251
      %v449 = vunpack.c.l.b16 %v259
      %v450 = vunpack.c.l.b16 %v252
      %v451 = vunpack.c.l.b16 %v260
      %v452 = vunpack.c.l.b16 %v253
      %v453 = vunpack.c.l.b16 %v261
      %v454 = vunpack.c.l.b16 %v254
      %v455 = vunpack.c.l.b16 %v262
      %v456 = vpack.c.b16 %v441, %v440
      %v457 = vpack.c.b16 %v443, %v442
      %v458 = vpack.c.b16 %v445, %v444
      %v459 = vpack.c.b16 %v447, %v446
      %v460 = vpack.c.b16 %v449, %v448
      %v461 = vpack.c.b16 %v451, %v450
      %v462 = vpack.c.b16 %v453, %v452
      %v463 = vpack.c.b16 %v455, %v454
      %v465 = vshrl.u32 %v456, 16
      %v467 = vshll.u32 %v456, 16
      %v469 = vrot.slane %v467, 1
      %v470 = vor.u32 %v465, %v469
      %v472 = vshrl.u32 %v457, 16
      %v474 = vshll.u32 %v457, 16
      %v476 = vrot.slane %v474, 1
      %v477 = vor.u32 %v472, %v476
      %v479 = vshrl.u32 %v458, 16
      %v481 = vshll.u32 %v458, 16
      %v483 = vrot.slane %v481, 1
      %v484 = vor.u32 %v479, %v483
      %v486 = vshrl.u32 %v459, 16
      %v488 = vshll.u32 %v459, 16
      %v490 = vrot.slane %v488, 1
      %v491 = vor.u32 %v486, %v490
      %v493 = vshrl.u32 %v460, 16
      %v495 = vshll.u32 %v460, 16
      %v497 = vrot.slane %v495, 1
      %v498 = vor.u32 %v493, %v497
      %v500 = vshrl.u32 %v461, 16
      %v502 = vshll.u32 %v461, 16
      %v504 = vrot.slane %v502, 1
      %v505 = vor.u32 %v500, %v504
      %v507 = vshrl.u32 %v462, 16
      %v509 = vshll.u32 %v462, 16
      %v511 = vrot.slane %v509, 1
      %v512 = vor.u32 %v507, %v511
      %v514 = vshrl.u32 %v463, 16
      %v516 = vshll.u32 %v463, 16
      %v518 = vrot.slane %v516, 1
      %v519 = vor.u32 %v514, %v518
      %v528 = vunpack.c.l.b16 %v263
      %v529 = vunpack.c.l.b16 %v264
      %v530 = vunpack.c.l.b16 %v265
      %v531 = vunpack.c.l.b16 %v266
      %v532 = vunpack.c.l.b16 %v267
      %v533 = vunpack.c.l.b16 %v268
      %v534 = vunpack.c.l.b16 %v269
      %v535 = vunpack.c.l.b16 %v270
      %v536 = vpack.c.b16 %v441, %v528
      %v537 = vpack.c.b16 %v443, %v529
      %v538 = vpack.c.b16 %v445, %v530
      %v539 = vpack.c.b16 %v447, %v531
      %v540 = vpack.c.b16 %v449, %v532
      %v541 = vpack.c.b16 %v451, %v533
      %v542 = vpack.c.b16 %v453, %v534
      %v543 = vpack.c.b16 %v455, %v535
      %v544 = vrot.slane %v536, 1
      %v545 = vrot.slane %v537, 1
      %v546 = vrot.slane %v538, 1
      %v547 = vrot.slane %v539, 1
      %v548 = vrot.slane %v540, 1
      %v549 = vrot.slane %v541, 1
      %v550 = vrot.slane %v542, 1
      %v551 = vrot.slane %v543, 1
      %v568 = vunpack.c.l.b16 %v272
      %v569 = vunpack.c.l.b16 %v280
      %v570 = vunpack.c.l.b16 %v273
      %v571 = vunpack.c.l.b16 %v281
      %v572 = vunpack.c.l.b16 %v274
      %v573 = vunpack.c.l.b16 %v282
      %v574 = vunpack.c.l.b16 %v275
      %v575 = vunpack.c.l.b16 %v283
      %v576 = vunpack.c.l.b16 %v276
      %v577 = vunpack.c.l.b16 %v284
      %v578 = vunpack.c.l.b16 %v277
      %v579 = vunpack.c.l.b16 %v285
      %v580 = vunpack.c.l.b16 %v278
      %v581 = vunpack.c.l.b16 %v286
      %v582 = vunpack.c.l.b16 %v279
      %v583 = vunpack.c.l.b16 %v287
      %v584 = vpack.c.b16 %v569, %v568
      %v585 = vpack.c.b16 %v571, %v570
      %v586 = vpack.c.b16 %v573, %v572
      %v587 = vpack.c.b16 %v575, %v574
      %v588 = vpack.c.b16 %v577, %v576
      %v589 = vpack.c.b16 %v579, %v578
      %v590 = vpack.c.b16 %v581, %v580
      %v591 = vpack.c.b16 %v583, %v582
      %v593 = vshrl.u32 %v584, 16
      %v595 = vshll.u32 %v584, 16
      %v597 = vrot.slane %v595, 1
      %v598 = vor.u32 %v593, %v597
      %v600 = vshrl.u32 %v585, 16
      %v602 = vshll.u32 %v585, 16
      %v604 = vrot.slane %v602, 1
      %v605 = vor.u32 %v600, %v604
      %v607 = vshrl.u32 %v586, 16
      %v609 = vshll.u32 %v586, 16
      %v611 = vrot.slane %v609, 1
      %v612 = vor.u32 %v607, %v611
      %v614 = vshrl.u32 %v587, 16
      %v616 = vshll.u32 %v587, 16
      %v618 = vrot.slane %v616, 1
      %v619 = vor.u32 %v614, %v618
      %v621 = vshrl.u32 %v588, 16
      %v623 = vshll.u32 %v588, 16
      %v625 = vrot.slane %v623, 1
      %v626 = vor.u32 %v621, %v625
      %v628 = vshrl.u32 %v589, 16
      %v630 = vshll.u32 %v589, 16
      %v632 = vrot.slane %v630, 1
      %v633 = vor.u32 %v628, %v632
      %v635 = vshrl.u32 %v590, 16
      %v637 = vshll.u32 %v590, 16
      %v639 = vrot.slane %v637, 1
      %v640 = vor.u32 %v635, %v639
      %v642 = vshrl.u32 %v591, 16
      %v644 = vshll.u32 %v591, 16
      %v646 = vrot.slane %v644, 1
      %v647 = vor.u32 %v642, %v646
      %v656 = vunpack.c.l.b16 %v288
      %v657 = vunpack.c.l.b16 %v289
      %v658 = vunpack.c.l.b16 %v290
      %v659 = vunpack.c.l.b16 %v291
      %v660 = vunpack.c.l.b16 %v292
      %v661 = vunpack.c.l.b16 %v293
      %v662 = vunpack.c.l.b16 %v294
      %v663 = vunpack.c.l.b16 %v295
      %v664 = vpack.c.b16 %v569, %v656
      %v665 = vpack.c.b16 %v571, %v657
      %v666 = vpack.c.b16 %v573, %v658
      %v667 = vpack.c.b16 %v575, %v659
      %v668 = vpack.c.b16 %v577, %v660
      %v669 = vpack.c.b16 %v579, %v661
      %v670 = vpack.c.b16 %v581, %v662
      %v671 = vpack.c.b16 %v583, %v663
      %v672 = vrot.slane %v664, 1
      %v673 = vrot.slane %v665, 1
      %v674 = vrot.slane %v666, 1
      %v675 = vrot.slane %v667, 1
      %v676 = vrot.slane %v668, 1
      %v677 = vrot.slane %v669, 1
      %v678 = vrot.slane %v670, 1
      %v679 = vrot.slane %v671, 1
      %v680 = vunpack.c.l.b16 %v342
      %v681 = vunpack.c.l.b16 %v416
      %v682 = vunpack.c.l.b16 %v470
      %v683 = vunpack.c.l.b16 %v544
      %v684 = vunpack.c.l.b16 %v598
      %v685 = vunpack.c.l.b16 %v672
      %v686 = vunpack.c.l.b16 %v349
      %v687 = vunpack.c.l.b16 %v417
      %v688 = vunpack.c.l.b16 %v477
      %v689 = vunpack.c.l.b16 %v545
      %v690 = vunpack.c.l.b16 %v605
      %v691 = vunpack.c.l.b16 %v673
      %v692 = vunpack.c.l.b16 %v356
      %v693 = vunpack.c.l.b16 %v418
      %v694 = vunpack.c.l.b16 %v484
      %v695 = vunpack.c.l.b16 %v546
      %v696 = vunpack.c.l.b16 %v612
      %v697 = vunpack.c.l.b16 %v674
      %v698 = vunpack.c.l.b16 %v363
      %v699 = vunpack.c.l.b16 %v419
      %v700 = vunpack.c.l.b16 %v491
      %v701 = vunpack.c.l.b16 %v547
      %v702 = vunpack.c.l.b16 %v619
      %v703 = vunpack.c.l.b16 %v675
      %v704 = vunpack.c.l.b16 %v370
      %v705 = vunpack.c.l.b16 %v420
      %v706 = vunpack.c.l.b16 %v498
      %v707 = vunpack.c.l.b16 %v548
      %v708 = vunpack.c.l.b16 %v626
      %v709 = vunpack.c.l.b16 %v676
      %v710 = vunpack.c.l.b16 %v377
      %v711 = vunpack.c.l.b16 %v421
      %v712 = vunpack.c.l.b16 %v505
      %v713 = vunpack.c.l.b16 %v549
      %v714 = vunpack.c.l.b16 %v633
      %v715 = vunpack.c.l.b16 %v677
      %v716 = vunpack.c.l.b16 %v384
      %v717 = vunpack.c.l.b16 %v422
      %v718 = vunpack.c.l.b16 %v512
      %v719 = vunpack.c.l.b16 %v550
      %v720 = vunpack.c.l.b16 %v640
      %v721 = vunpack.c.l.b16 %v678
      %v722 = vunpack.c.l.b16 %v391
      %v723 = vunpack.c.l.b16 %v423
      %v724 = vunpack.c.l.b16 %v519
      %v725 = vunpack.c.l.b16 %v551
      %v726 = vunpack.c.l.b16 %v647
      %v727 = vunpack.c.l.b16 %v679
      %v728 = vld [vmem:[%s1] sm:$0xf]
      %v729 = vld [vmem:[%s1 + $0x4] sm:$0xf]
      %v730 = vld [vmem:[%s1 + $0x8] sm:$0xf]
      %v731 = vld [vmem:[%s1 + $0xc] sm:$0xf]
      %v732 = vld [vmem:[%s1 + $0x10] sm:$0xf]
      %v733 = vld [vmem:[%s1 + $0x14] sm:$0xf]
      %v734 = vld [vmem:[%s1 + $0x18] sm:$0xf]
      %v735 = vld [vmem:[%s1 + $0x1c] sm:$0xf]
      %v736 = vld [vmem:[%s1 + $0x20] sm:$0xf]
      %v737 = vld [vmem:[%s1 + $0x24] sm:$0xf]
      %v738 = vld [vmem:[%s1 + $0x28] sm:$0xf]
      %v739 = vld [vmem:[%s1 + $0x2c] sm:$0xf]
      %v740 = vld [vmem:[%s1 + $0x30] sm:$0xf]
      %v741 = vld [vmem:[%s1 + $0x34] sm:$0xf]
      %v742 = vld [vmem:[%s1 + $0x38] sm:$0xf]
      %v743 = vld [vmem:[%s1 + $0x3c] sm:$0xf]
      %v744 = vld [vmem:[%s1 + $0x40] sm:$0xf]
      %v745 = vld [vmem:[%s1 + $0x44] sm:$0xf]
      %v746 = vld [vmem:[%s1 + $0x48] sm:$0xf]
      %v747 = vld [vmem:[%s1 + $0x4c] sm:$0xf]
      %v748 = vld [vmem:[%s1 + $0x50] sm:$0xf]
      %v749 = vld [vmem:[%s1 + $0x54] sm:$0xf]
      %v750 = vld [vmem:[%s1 + $0x58] sm:$0xf]
      %v751 = vld [vmem:[%s1 + $0x5c] sm:$0xf]
      %v752 = vld [vmem:[%s1 + $0x60] sm:$0xf]
      %v753 = vld [vmem:[%s1 + $0x64] sm:$0xf]
      %v754 = vld [vmem:[%s1 + $0x68] sm:$0xf]
      %v755 = vld [vmem:[%s1 + $0x6c] sm:$0xf]
      %v756 = vld [vmem:[%s1 + $0x70] sm:$0xf]
      %v757 = vld [vmem:[%s1 + $0x74] sm:$0xf]
      %v758 = vld [vmem:[%s1 + $0x78] sm:$0xf]
      %v759 = vld [vmem:[%s1 + $0x7c] sm:$0xf]
      %v760 = vld [vmem:[%s1 + $0x80] sm:$0xf]
      %v761 = vld [vmem:[%s1 + $0x84] sm:$0xf]
      %v762 = vld [vmem:[%s1 + $0x88] sm:$0xf]
      %v763 = vld [vmem:[%s1 + $0x8c] sm:$0xf]
      %v764 = vld [vmem:[%s1 + $0x90] sm:$0xf]
      %v765 = vld [vmem:[%s1 + $0x94] sm:$0xf]
      %v766 = vld [vmem:[%s1 + $0x98] sm:$0xf]
      %v767 = vld [vmem:[%s1 + $0x9c] sm:$0xf]
      %v768 = vld [vmem:[%s1 + $0xa0] sm:$0xf]
      %v769 = vld [vmem:[%s1 + $0xa4] sm:$0xf]
      %v770 = vld [vmem:[%s1 + $0xa8] sm:$0xf]
      %v771 = vld [vmem:[%s1 + $0xac] sm:$0xf]
      %v772 = vld [vmem:[%s1 + $0xb0] sm:$0xf]
      %v773 = vld [vmem:[%s1 + $0xb4] sm:$0xf]
      %v774 = vld [vmem:[%s1 + $0xb8] sm:$0xf]
      %v775 = vld [vmem:[%s1 + $0xbc] sm:$0xf]
      %v776 = vld [vmem:[%s1 + $0xc0] sm:$0xf]
      %v777 = vld [vmem:[%s1 + $0xc4] sm:$0xf]
      %v778 = vld [vmem:[%s1 + $0xc8] sm:$0xf]
      %v779 = vld [vmem:[%s1 + $0xcc] sm:$0xf]
      %v780 = vld [vmem:[%s1 + $0xd0] sm:$0xf]
      %v781 = vld [vmem:[%s1 + $0xd4] sm:$0xf]
      %v782 = vld [vmem:[%s1 + $0xd8] sm:$0xf]
      %v783 = vld [vmem:[%s1 + $0xdc] sm:$0xf]
      %v784 = vld [vmem:[%s1 + $0xe0] sm:$0xf]
      %v785 = vld [vmem:[%s1 + $0xe4] sm:$0xf]
      %v786 = vld [vmem:[%s1 + $0xe8] sm:$0xf]
      %v787 = vld [vmem:[%s1 + $0xec] sm:$0xf]
      %v788 = vld [vmem:[%s1 + $0xf0] sm:$0xf]
      %v789 = vld [vmem:[%s1 + $0xf4] sm:$0xf]
      %v790 = vld [vmem:[%s1 + $0xf8] sm:$0xf]
      %v791 = vld [vmem:[%s1 + $0xfc] sm:$0xf]
      %v792 = vld [vmem:[%s1 + $0x100] sm:$0xf]
      %v793 = vld [vmem:[%s1 + $0x104] sm:$0xf]
      %v794 = vld [vmem:[%s1 + $0x108] sm:$0xf]
      %v795 = vld [vmem:[%s1 + $0x10c] sm:$0xf]
      %v796 = vld [vmem:[%s1 + $0x110] sm:$0xf]
      %v797 = vld [vmem:[%s1 + $0x114] sm:$0xf]
      %v798 = vld [vmem:[%s1 + $0x118] sm:$0xf]
      %v799 = vld [vmem:[%s1 + $0x11c] sm:$0xf]
      %v800 = vld [vmem:[%s1 + $0x120] sm:$0xf]
      %v801 = vld [vmem:[%s1 + $0x124] sm:$0xf]
      %v802 = vld [vmem:[%s1 + $0x128] sm:$0xf]
      %v803 = vld [vmem:[%s1 + $0x12c] sm:$0xf]
      %v804 = vld [vmem:[%s1 + $0x130] sm:$0xf]
      %v805 = vld [vmem:[%s1 + $0x134] sm:$0xf]
      %v806 = vld [vmem:[%s1 + $0x138] sm:$0xf]
      %v807 = vld [vmem:[%s1 + $0x13c] sm:$0xf]
      %v808 = vld [vmem:[%s1 + $0x140] sm:$0xf]
      %v809 = vld [vmem:[%s1 + $0x144] sm:$0xf]
      %v810 = vld [vmem:[%s1 + $0x148] sm:$0xf]
      %v811 = vld [vmem:[%s1 + $0x14c] sm:$0xf]
      %v812 = vld [vmem:[%s1 + $0x150] sm:$0xf]
      %v813 = vld [vmem:[%s1 + $0x154] sm:$0xf]
      %v814 = vld [vmem:[%s1 + $0x158] sm:$0xf]
      %v815 = vld [vmem:[%s1 + $0x15c] sm:$0xf]
      %v816 = vld [vmem:[%s1 + $0x160] sm:$0xf]
      %v817 = vld [vmem:[%s1 + $0x164] sm:$0xf]
      %v818 = vld [vmem:[%s1 + $0x168] sm:$0xf]
      %v819 = vld [vmem:[%s1 + $0x16c] sm:$0xf]
      %v820 = vld [vmem:[%s1 + $0x170] sm:$0xf]
      %v821 = vld [vmem:[%s1 + $0x174] sm:$0xf]
      %v822 = vld [vmem:[%s1 + $0x178] sm:$0xf]
      %v823 = vld [vmem:[%s1 + $0x17c] sm:$0xf]
      %v824 = vld [vmem:[%s1 + $0x180] sm:$0xf]
      %v825 = vld [vmem:[%s1 + $0x184] sm:$0xf]
      %v826 = vld [vmem:[%s1 + $0x188] sm:$0xf]
      %v827 = vld [vmem:[%s1 + $0x18c] sm:$0xf]
      %v828 = vld [vmem:[%s1 + $0x190] sm:$0xf]
      %v829 = vld [vmem:[%s1 + $0x194] sm:$0xf]
      %v830 = vld [vmem:[%s1 + $0x198] sm:$0xf]
      %v831 = vld [vmem:[%s1 + $0x19c] sm:$0xf]
      %v832 = vld [vmem:[%s1 + $0x1a0] sm:$0xf]
      %v833 = vld [vmem:[%s1 + $0x1a4] sm:$0xf]
      %v834 = vld [vmem:[%s1 + $0x1a8] sm:$0xf]
      %v835 = vld [vmem:[%s1 + $0x1ac] sm:$0xf]
      %v836 = vld [vmem:[%s1 + $0x1b0] sm:$0xf]
      %v837 = vld [vmem:[%s1 + $0x1b4] sm:$0xf]
      %v838 = vld [vmem:[%s1 + $0x1b8] sm:$0xf]
      %v839 = vld [vmem:[%s1 + $0x1bc] sm:$0xf]
      %v840 = vld [vmem:[%s1 + $0x1c0] sm:$0xf]
      %v841 = vld [vmem:[%s1 + $0x1c4] sm:$0xf]
      %v842 = vld [vmem:[%s1 + $0x1c8] sm:$0xf]
      %v843 = vld [vmem:[%s1 + $0x1cc] sm:$0xf]
      %v844 = vld [vmem:[%s1 + $0x1d0] sm:$0xf]
      %v845 = vld [vmem:[%s1 + $0x1d4] sm:$0xf]
      %v846 = vld [vmem:[%s1 + $0x1d8] sm:$0xf]
      %v847 = vld [vmem:[%s1 + $0x1dc] sm:$0xf]
      %v848 = vld [vmem:[%s1 + $0x1e0] sm:$0xf]
      %v849 = vld [vmem:[%s1 + $0x1e4] sm:$0xf]
      %v850 = vld [vmem:[%s1 + $0x1e8] sm:$0xf]
      %v851 = vld [vmem:[%s1 + $0x1ec] sm:$0xf]
      %v852 = vld [vmem:[%s1 + $0x1f0] sm:$0xf]
      %v853 = vld [vmem:[%s1 + $0x1f4] sm:$0xf]
      %v854 = vld [vmem:[%s1 + $0x1f8] sm:$0xf]
      %v855 = vld [vmem:[%s1 + $0x1fc] sm:$0xf]
      %v856 = vld [vmem:[%s1 + $0x200] sm:$0xf]
      %v857 = vld [vmem:[%s1 + $0x204] sm:$0xf]
      %v858 = vld [vmem:[%s1 + $0x208] sm:$0xf]
      %v859 = vld [vmem:[%s1 + $0x20c] sm:$0xf]
      %v860 = vld [vmem:[%s1 + $0x210] sm:$0xf]
      %v861 = vld [vmem:[%s1 + $0x214] sm:$0xf]
      %v862 = vld [vmem:[%s1 + $0x218] sm:$0xf]
      %v863 = vld [vmem:[%s1 + $0x21c] sm:$0xf]
      %v864 = vld [vmem:[%s1 + $0x220] sm:$0xf]
      %v865 = vld [vmem:[%s1 + $0x224] sm:$0xf]
      %v866 = vld [vmem:[%s1 + $0x228] sm:$0xf]
      %v867 = vld [vmem:[%s1 + $0x22c] sm:$0xf]
      %v868 = vld [vmem:[%s1 + $0x230] sm:$0xf]
      %v869 = vld [vmem:[%s1 + $0x234] sm:$0xf]
      %v870 = vld [vmem:[%s1 + $0x238] sm:$0xf]
      %v871 = vld [vmem:[%s1 + $0x23c] sm:$0xf]
      %v872 = vld [vmem:[%s2] sm:$0x1]
      %v874 = vlaneseq
      %v875 = vshrl.u32 %v874, 7
      %v876 = vsub.s32 0, %v875
      %v877 = vrot.slane %v872, %v876
      %v879 = vpack.c.b16 %v314, %v312
      %v880 = vpack.c.b16 %v686, %v680
      %v881 = vpack.c.b16 %v687, %v681
      %v882 = vpack.c.b16 %v442, %v440
      %v883 = vpack.c.b16 %v688, %v682
      %v884 = vpack.c.b16 %v689, %v683
      %v885 = vpack.c.b16 %v570, %v568
      %v886 = vpack.c.b16 %v690, %v684
      %v887 = vpack.c.b16 %v691, %v685
      %v888 = vpack.c.b16 %v318, %v316
      %v889 = vpack.c.b16 %v698, %v692
      %v890 = vpack.c.b16 %v699, %v693
      %v891 = vpack.c.b16 %v446, %v444
      %v892 = vpack.c.b16 %v700, %v694
      %v893 = vpack.c.b16 %v701, %v695
      %v894 = vpack.c.b16 %v574, %v572
      %v895 = vpack.c.b16 %v702, %v696
      %v896 = vpack.c.b16 %v703, %v697
      %v897 = vpack.c.b16 %v322, %v320
      %v898 = vpack.c.b16 %v710, %v704
      %v899 = vpack.c.b16 %v711, %v705
      %v900 = vpack.c.b16 %v450, %v448
      %v901 = vpack.c.b16 %v712, %v706
      %v902 = vpack.c.b16 %v713, %v707
      %v903 = vpack.c.b16 %v578, %v576
      %v904 = vpack.c.b16 %v714, %v708
      %v905 = vpack.c.b16 %v715, %v709
      %v906 = vpack.c.b16 %v326, %v324
      %v907 = vpack.c.b16 %v722, %v716
      %v908 = vpack.c.b16 %v723, %v717
      %v909 = vpack.c.b16 %v454, %v452
      %v910 = vpack.c.b16 %v724, %v718
      %v911 = vpack.c.b16 %v725, %v719
      %v912 = vpack.c.b16 %v582, %v580
      %v913 = vpack.c.b16 %v726, %v720
      %v914 = vpack.c.b16 %v727, %v721
      %v1095 = vunpack.c.l.b16 %v728
      %v1096 = vunpack.c.l.b16 %v729
      %v1097 = vunpack.c.l.b16 %v730
      %v1098 = vunpack.c.l.b16 %v731
      %v1099 = vunpack.c.l.b16 %v732
      %v1100 = vunpack.c.l.b16 %v733
      %v1101 = vunpack.c.l.b16 %v734
      %v1102 = vunpack.c.l.b16 %v735
      %v1103 = vunpack.c.l.b16 %v736
      %v1104 = vunpack.c.l.b16 %v737
      %v1105 = vunpack.c.l.b16 %v738
      %v1106 = vunpack.c.l.b16 %v739
      %v1107 = vunpack.c.l.b16 %v740
      %v1108 = vunpack.c.l.b16 %v741
      %v1109 = vunpack.c.l.b16 %v742
      %v1110 = vunpack.c.l.b16 %v743
      %v1111 = vunpack.c.l.b16 %v744
      %v1112 = vunpack.c.l.b16 %v745
      %v1113 = vunpack.c.l.b16 %v746
      %v1114 = vunpack.c.l.b16 %v747
      %v1115 = vunpack.c.l.b16 %v748
      %v1116 = vunpack.c.l.b16 %v749
      %v1117 = vunpack.c.l.b16 %v750
      %v1118 = vunpack.c.l.b16 %v751
      %v1119 = vunpack.c.l.b16 %v752
      %v1120 = vunpack.c.l.b16 %v753
      %v1121 = vunpack.c.l.b16 %v754
      %v1122 = vunpack.c.l.b16 %v755
      %v1123 = vunpack.c.l.b16 %v756
      %v1124 = vunpack.c.l.b16 %v757
      %v1125 = vunpack.c.l.b16 %v758
      %v1126 = vunpack.c.l.b16 %v759
      %v1127 = vunpack.c.l.b16 %v760
      %v1128 = vunpack.c.l.b16 %v761
      %v1129 = vunpack.c.l.b16 %v762
      %v1130 = vunpack.c.l.b16 %v763
      %v1131 = vunpack.c.l.b16 %v764
      %v1132 = vunpack.c.l.b16 %v765
      %v1133 = vunpack.c.l.b16 %v766
      %v1134 = vunpack.c.l.b16 %v767
      %v1135 = vunpack.c.l.b16 %v768
      %v1136 = vunpack.c.l.b16 %v769
      %v1137 = vunpack.c.l.b16 %v770
      %v1138 = vunpack.c.l.b16 %v771
      %v1139 = vunpack.c.l.b16 %v772
      %v1140 = vunpack.c.l.b16 %v773
      %v1141 = vunpack.c.l.b16 %v774
      %v1142 = vunpack.c.l.b16 %v775
      %v1143 = vunpack.c.l.b16 %v776
      %v1144 = vunpack.c.l.b16 %v777
      %v1145 = vunpack.c.l.b16 %v778
      %v1146 = vunpack.c.l.b16 %v779
      %v1147 = vunpack.c.l.b16 %v780
      %v1148 = vunpack.c.l.b16 %v781
      %v1149 = vunpack.c.l.b16 %v782
      %v1150 = vunpack.c.l.b16 %v783
      %v1151 = vunpack.c.l.b16 %v784
      %v1152 = vunpack.c.l.b16 %v785
      %v1153 = vunpack.c.l.b16 %v786
      %v1154 = vunpack.c.l.b16 %v787
      %v1155 = vunpack.c.l.b16 %v788
      %v1156 = vunpack.c.l.b16 %v789
      %v1157 = vunpack.c.l.b16 %v790
      %v1158 = vunpack.c.l.b16 %v791
      %v1159 = vunpack.c.l.b16 %v792
      %v1160 = vunpack.c.l.b16 %v793
      %v1161 = vunpack.c.l.b16 %v794
      %v1162 = vunpack.c.l.b16 %v795
      %v1163 = vunpack.c.l.b16 %v796
      %v1164 = vunpack.c.l.b16 %v797
      %v1165 = vunpack.c.l.b16 %v798
      %v1166 = vunpack.c.l.b16 %v799
      %v1167 = vunpack.c.l.b16 %v800
      %v1168 = vunpack.c.l.b16 %v801
      %v1169 = vunpack.c.l.b16 %v802
      %v1170 = vunpack.c.l.b16 %v803
      %v1171 = vunpack.c.l.b16 %v804
      %v1172 = vunpack.c.l.b16 %v805
      %v1173 = vunpack.c.l.b16 %v806
      %v1174 = vunpack.c.l.b16 %v807
      %v1175 = vunpack.c.l.b16 %v808
      %v1176 = vunpack.c.l.b16 %v809
      %v1177 = vunpack.c.l.b16 %v810
      %v1178 = vunpack.c.l.b16 %v811
      %v1179 = vunpack.c.l.b16 %v812
      %v1180 = vunpack.c.l.b16 %v813
      %v1181 = vunpack.c.l.b16 %v814
      %v1182 = vunpack.c.l.b16 %v815
      %v1183 = vunpack.c.l.b16 %v816
      %v1184 = vunpack.c.l.b16 %v817
      %v1185 = vunpack.c.l.b16 %v818
      %v1186 = vunpack.c.l.b16 %v819
      %v1187 = vunpack.c.l.b16 %v820
      %v1188 = vunpack.c.l.b16 %v821
      %v1189 = vunpack.c.l.b16 %v822
      %v1190 = vunpack.c.l.b16 %v823
      %v1191 = vunpack.c.l.b16 %v824
      %v1192 = vunpack.c.l.b16 %v825
      %v1193 = vunpack.c.l.b16 %v826
      %v1194 = vunpack.c.l.b16 %v827
      %v1195 = vunpack.c.l.b16 %v828
      %v1196 = vunpack.c.l.b16 %v829
      %v1197 = vunpack.c.l.b16 %v830
      %v1198 = vunpack.c.l.b16 %v831
      %v1199 = vunpack.c.l.b16 %v832
      %v1200 = vunpack.c.l.b16 %v833
      %v1201 = vunpack.c.l.b16 %v834
      %v1202 = vunpack.c.l.b16 %v835
      %v1203 = vunpack.c.l.b16 %v836
      %v1204 = vunpack.c.l.b16 %v837
      %v1205 = vunpack.c.l.b16 %v838
      %v1206 = vunpack.c.l.b16 %v839
      %v1207 = vunpack.c.l.b16 %v840
      %v1208 = vunpack.c.l.b16 %v841
      %v1209 = vunpack.c.l.b16 %v842
      %v1210 = vunpack.c.l.b16 %v843
      %v1211 = vunpack.c.l.b16 %v844
      %v1212 = vunpack.c.l.b16 %v845
      %v1213 = vunpack.c.l.b16 %v846
      %v1214 = vunpack.c.l.b16 %v847
      %v1215 = vunpack.c.l.b16 %v848
      %v1216 = vunpack.c.l.b16 %v849
      %v1217 = vunpack.c.l.b16 %v850
      %v1218 = vunpack.c.l.b16 %v851
      %v1219 = vunpack.c.l.b16 %v852
      %v1220 = vunpack.c.l.b16 %v853
      %v1221 = vunpack.c.l.b16 %v854
      %v1222 = vunpack.c.l.b16 %v855
      %v1223 = vunpack.c.l.b16 %v856
      %v1224 = vunpack.c.l.b16 %v857
      %v1225 = vunpack.c.l.b16 %v858
      %v1226 = vunpack.c.l.b16 %v859
      %v1227 = vunpack.c.l.b16 %v860
      %v1228 = vunpack.c.l.b16 %v861
      %v1229 = vunpack.c.l.b16 %v862
      %v1230 = vunpack.c.l.b16 %v863
      %v1231 = vunpack.c.l.b16 %v864
      %v1232 = vunpack.c.l.b16 %v865
      %v1233 = vunpack.c.l.b16 %v866
      %v1234 = vunpack.c.l.b16 %v867
      %v1235 = vunpack.c.l.b16 %v868
      %v1236 = vunpack.c.l.b16 %v869
      %v1237 = vunpack.c.l.b16 %v870
      %v1238 = vunpack.c.l.b16 %v871
      %v1239 = vpack.c.b16 %v1096, %v1095
      %v1240 = vpack.c.b16 %v1098, %v1097
      %v1241 = vpack.c.b16 %v1100, %v1099
      %v1242 = vpack.c.b16 %v1102, %v1101
      %v1243 = vpack.c.b16 %v1104, %v1103
      %v1244 = vpack.c.b16 %v1106, %v1105
      %v1245 = vpack.c.b16 %v1108, %v1107
      %v1246 = vpack.c.b16 %v1110, %v1109
      %v1247 = vpack.c.b16 %v1112, %v1111
      %v1248 = vpack.c.b16 %v1114, %v1113
      %v1249 = vpack.c.b16 %v1116, %v1115
      %v1250 = vpack.c.b16 %v1118, %v1117
      %v1251 = vpack.c.b16 %v1120, %v1119
      %v1252 = vpack.c.b16 %v1122, %v1121
      %v1253 = vpack.c.b16 %v1124, %v1123
      %v1254 = vpack.c.b16 %v1126, %v1125
      %v1255 = vpack.c.b16 %v1128, %v1127
      %v1256 = vpack.c.b16 %v1130, %v1129
      %v1257 = vpack.c.b16 %v1132, %v1131
      %v1258 = vpack.c.b16 %v1134, %v1133
      %v1259 = vpack.c.b16 %v1136, %v1135
      %v1260 = vpack.c.b16 %v1138, %v1137
      %v1261 = vpack.c.b16 %v1140, %v1139
      %v1262 = vpack.c.b16 %v1142, %v1141
      %v1263 = vpack.c.b16 %v1144, %v1143
      %v1264 = vpack.c.b16 %v1146, %v1145
      %v1265 = vpack.c.b16 %v1148, %v1147
      %v1266 = vpack.c.b16 %v1150, %v1149
      %v1267 = vpack.c.b16 %v1152, %v1151
      %v1268 = vpack.c.b16 %v1154, %v1153
      %v1269 = vpack.c.b16 %v1156, %v1155
      %v1270 = vpack.c.b16 %v1158, %v1157
      %v1271 = vpack.c.b16 %v1160, %v1159
      %v1272 = vpack.c.b16 %v1162, %v1161
      %v1273 = vpack.c.b16 %v1164, %v1163
      %v1274 = vpack.c.b16 %v1166, %v1165
      %v1275 = vpack.c.b16 %v1168, %v1167
      %v1276 = vpack.c.b16 %v1170, %v1169
      %v1277 = vpack.c.b16 %v1172, %v1171
      %v1278 = vpack.c.b16 %v1174, %v1173
      %v1279 = vpack.c.b16 %v1176, %v1175
      %v1280 = vpack.c.b16 %v1178, %v1177
      %v1281 = vpack.c.b16 %v1180, %v1179
      %v1282 = vpack.c.b16 %v1182, %v1181
      %v1283 = vpack.c.b16 %v1184, %v1183
      %v1284 = vpack.c.b16 %v1186, %v1185
      %v1285 = vpack.c.b16 %v1188, %v1187
      %v1286 = vpack.c.b16 %v1190, %v1189
      %v1287 = vpack.c.b16 %v1192, %v1191
      %v1288 = vpack.c.b16 %v1194, %v1193
      %v1289 = vpack.c.b16 %v1196, %v1195
      %v1290 = vpack.c.b16 %v1198, %v1197
      %v1291 = vpack.c.b16 %v1200, %v1199
      %v1292 = vpack.c.b16 %v1202, %v1201
      %v1293 = vpack.c.b16 %v1204, %v1203
      %v1294 = vpack.c.b16 %v1206, %v1205
      %v1295 = vpack.c.b16 %v1208, %v1207
      %v1296 = vpack.c.b16 %v1210, %v1209
      %v1297 = vpack.c.b16 %v1212, %v1211
      %v1298 = vpack.c.b16 %v1214, %v1213
      %v1299 = vpack.c.b16 %v1216, %v1215
      %v1300 = vpack.c.b16 %v1218, %v1217
      %v1301 = vpack.c.b16 %v1220, %v1219
      %v1302 = vpack.c.b16 %v1222, %v1221
      %v1303 = vpack.c.b16 %v1224, %v1223
      %v1304 = vpack.c.b16 %v1226, %v1225
      %v1305 = vpack.c.b16 %v1228, %v1227
      %v1306 = vpack.c.b16 %v1230, %v1229
      %v1307 = vpack.c.b16 %v1232, %v1231
      %v1308 = vpack.c.b16 %v1234, %v1233
      %v1309 = vpack.c.b16 %v1236, %v1235
      %v1310 = vpack.c.b16 %v1238, %v1237
      %1383 = vmatprep.subr.bf16.mxu0 0
      %1384 = vmatpush1.bf16.msra.mxu0 %v1239
      %1385 = vmatprep.subr.bf16.mxu0 0
      %1386 = vmatpush1.bf16.msra.mxu0 %v1240
      %1387 = vmatprep.subr.bf16.mxu0 0
      %1388 = vmatpush1.bf16.msra.mxu0 %v1241
      %1389 = vmatprep.subr.bf16.mxu0 0
      %1390 = vmatpush1.bf16.msra.mxu0 %v1242
      %1391 = vmatprep.subr.bf16.mxu0 0
      %1392 = vmatpush1.bf16.msra.mxu0 %v1243
      %1393 = vmatprep.subr.bf16.mxu0 0
      %1394 = vmatpush1.bf16.msra.mxu0 %v1244
      %1395 = vmatprep.subr.bf16.mxu0 0
      %1396 = vmatpush1.bf16.msra.mxu0 %v1245
      %1397 = vmatprep.subr.bf16.mxu0 0
      %1398 = vmatpush1.bf16.msra.mxu0 %v1246
      %1399 = vmatprep.subr.bf16.mxu0 0
      %1400 = vmatpush1.bf16.msra.mxu0 %v1247
      %1401 = vmatprep.subr.bf16.mxu0 0
      %1402 = vmatpush1.bf16.msra.mxu0 %v1248
      %1403 = vmatprep.subr.bf16.mxu0 0
      %1404 = vmatpush1.bf16.msra.mxu0 %v1249
      %1405 = vmatprep.subr.bf16.mxu0 0
      %1406 = vmatpush1.bf16.msra.mxu0 %v1250
      %1407 = vmatprep.subr.bf16.mxu0 0
      %1408 = vmatpush1.bf16.msra.mxu0 %v1251
      %1409 = vmatprep.subr.bf16.mxu0 0
      %1410 = vmatpush1.bf16.msra.mxu0 %v1252
      %1411 = vmatprep.subr.bf16.mxu0 0
      %1412 = vmatpush1.bf16.msra.mxu0 %v1253
      %1413 = vmatprep.subr.bf16.mxu0 0
      %1414 = vmatpush1.bf16.msra.mxu0 %v1254
      %1415 = vmatprep.mubr.bf16.mxu0 %v880
      %1416 = vmatmul.mubr.bf16.gmra.mrb[0].mxu0 %v879
      %v1417 = vpop.f32.mrb[0].mxu0
      %v1418 = vadd.f32 %v877, %v1417
      %v1419 = vpop.f32.mrb[0].mxu0
      %v1420 = vpop.f32.mrb[0].mxu0
      %v1421 = vadd.f32 %v877, %v1420
      %v1422 = vpop.f32.mrb[0].mxu0
      %1423 = vmatprep.mubr.bf16.mxu0 %v889
      %1424 = vmatmul.mubr.bf16.gmra.mrb[0].mxu0 %v888
      %v1425 = vpop.f32.mrb[0].mxu0
      %v1426 = vadd.f32 %v877, %v1425
      %v1427 = vpop.f32.mrb[0].mxu0
      %v1428 = vpop.f32.mrb[0].mxu0
      %v1429 = vadd.f32 %v877, %v1428
      %v1430 = vpop.f32.mrb[0].mxu0
      %1431 = vmatprep.mubr.bf16.mxu0 %v898
      %1432 = vmatmul.mubr.bf16.gmra.mrb[0].mxu0 %v897
      %v1433 = vpop.f32.mrb[0].mxu0
      %v1434 = vadd.f32 %v877, %v1433
      %v1435 = vpop.f32.mrb[0].mxu0
      %v1436 = vpop.f32.mrb[0].mxu0
      %v1437 = vadd.f32 %v877, %v1436
      %v1438 = vpop.f32.mrb[0].mxu0
      %1439 = vmatprep.mubr.bf16.mxu0 %v907
      %1440 = vmatmul.mubr.bf16.gmra.mrb[0].mxu0 %v906
      %v1441 = vpop.f32.mrb[0].mxu0
      %v1442 = vadd.f32 %v877, %v1441
      %v1443 = vpop.f32.mrb[0].mxu0
      %v1444 = vpop.f32.mrb[0].mxu0
      %v1445 = vadd.f32 %v877, %v1444
      %v1446 = vpop.f32.mrb[0].mxu0
      %1447 = vdwg.mxu0
      %1448 = vmatprep.subr.bf16.mxu0 0
      %1449 = vmatpush1.bf16.msra.mxu0 %v1255
      %1450 = vmatprep.subr.bf16.mxu0 0
      %1451 = vmatpush1.bf16.msra.mxu0 %v1256
      %1452 = vmatprep.subr.bf16.mxu0 0
      %1453 = vmatpush1.bf16.msra.mxu0 %v1257
      %1454 = vmatprep.subr.bf16.mxu0 0
      %1455 = vmatpush1.bf16.msra.mxu0 %v1258
      %1456 = vmatprep.subr.bf16.mxu0 0
      %1457 = vmatpush1.bf16.msra.mxu0 %v1259
      %1458 = vmatprep.subr.bf16.mxu0 0
      %1459 = vmatpush1.bf16.msra.mxu0 %v1260
      %1460 = vmatprep.subr.bf16.mxu0 0
      %1461 = vmatpush1.bf16.msra.mxu0 %v1261
      %1462 = vmatprep.subr.bf16.mxu0 0
      %1463 = vmatpush1.bf16.msra.mxu0 %v1262
      %1464 = vmatprep.subr.bf16.mxu0 0
      %1465 = vmatpush1.bf16.msra.mxu0 %v1263
      %1466 = vmatprep.subr.bf16.mxu0 0
      %1467 = vmatpush1.bf16.msra.mxu0 %v1264
      %1468 = vmatprep.subr.bf16.mxu0 0
      %1469 = vmatpush1.bf16.msra.mxu0 %v1265
      %1470 = vmatprep.subr.bf16.mxu0 0
      %1471 = vmatpush1.bf16.msra.mxu0 %v1266
      %1472 = vmatprep.subr.bf16.mxu0 0
      %1473 = vmatpush1.bf16.msra.mxu0 %v1267
      %1474 = vmatprep.subr.bf16.mxu0 0
      %1475 = vmatpush1.bf16.msra.mxu0 %v1268
      %1476 = vmatprep.subr.bf16.mxu0 0
      %1477 = vmatpush1.bf16.msra.mxu0 %v1269
      %1478 = vmatprep.subr.bf16.mxu0 0
      %1479 = vmatpush1.bf16.msra.mxu0 %v1270
      %1480 = vmatprep.mubr.bf16.mxu0 %v882
      %1481 = vmatmul.mubr.bf16.gmra.mrb[0].mxu0 %v881
      %v1482 = vpop.f32.mrb[0].mxu0
      %v1483 = vadd.f32 %v1418, %v1482
      %v1484 = vpop.f32.mrb[0].mxu0
      %v1485 = vpop.f32.mrb[0].mxu0
      %v1486 = vadd.f32 %v1421, %v1485
      %v1487 = vpop.f32.mrb[0].mxu0
      %1488 = vmatprep.mubr.bf16.mxu0 %v891
      %1489 = vmatmul.mubr.bf16.gmra.mrb[0].mxu0 %v890
      %v1490 = vpop.f32.mrb[0].mxu0
      %v1491 = vadd.f32 %v1426, %v1490
      %v1492 = vpop.f32.mrb[0].mxu0
      %v1493 = vpop.f32.mrb[0].mxu0
      %v1494 = vadd.f32 %v1429, %v1493
      %v1495 = vpop.f32.mrb[0].mxu0
      %1496 = vmatprep.mubr.bf16.mxu0 %v900
      %1497 = vmatmul.mubr.bf16.gmra.mrb[0].mxu0 %v899
      %v1498 = vpop.f32.mrb[0].mxu0
      %v1499 = vadd.f32 %v1434, %v1498
      %v1500 = vpop.f32.mrb[0].mxu0
      %v1501 = vpop.f32.mrb[0].mxu0
      %v1502 = vadd.f32 %v1437, %v1501
      %v1503 = vpop.f32.mrb[0].mxu0
      %1504 = vmatprep.mubr.bf16.mxu0 %v909
      %1505 = vmatmul.mubr.bf16.gmra.mrb[0].mxu0 %v908
      %v1506 = vpop.f32.mrb[0].mxu0
      %v1507 = vadd.f32 %v1442, %v1506
      %v1508 = vpop.f32.mrb[0].mxu0
      %v1509 = vpop.f32.mrb[0].mxu0
      %v1510 = vadd.f32 %v1445, %v1509
      %v1511 = vpop.f32.mrb[0].mxu0
      %1512 = vdwg.mxu0
      %1513 = vmatprep.subr.bf16.mxu0 0
      %1514 = vmatpush1.bf16.msra.mxu0 %v1271
      %1515 = vmatprep.subr.bf16.mxu0 0
      %1516 = vmatpush1.bf16.msra.mxu0 %v1272
      %1517 = vmatprep.subr.bf16.mxu0 0
      %1518 = vmatpush1.bf16.msra.mxu0 %v1273
      %1519 = vmatprep.subr.bf16.mxu0 0
      %1520 = vmatpush1.bf16.msra.mxu0 %v1274
      %1521 = vmatprep.subr.bf16.mxu0 0
      %1522 = vmatpush1.bf16.msra.mxu0 %v1275
      %1523 = vmatprep.subr.bf16.mxu0 0
      %1524 = vmatpush1.bf16.msra.mxu0 %v1276
      %1525 = vmatprep.subr.bf16.mxu0 0
      %1526 = vmatpush1.bf16.msra.mxu0 %v1277
      %1527 = vmatprep.subr.bf16.mxu0 0
      %1528 = vmatpush1.bf16.msra.mxu0 %v1278
      %1529 = vmatprep.subr.bf16.mxu0 0
      %1530 = vmatpush1.bf16.msra.mxu0 %v1279
      %1531 = vmatprep.subr.bf16.mxu0 0
      %1532 = vmatpush1.bf16.msra.mxu0 %v1280
      %1533 = vmatprep.subr.bf16.mxu0 0
      %1534 = vmatpush1.bf16.msra.mxu0 %v1281
      %1535 = vmatprep.subr.bf16.mxu0 0
      %1536 = vmatpush1.bf16.msra.mxu0 %v1282
      %1537 = vmatprep.subr.bf16.mxu0 0
      %1538 = vmatpush1.bf16.msra.mxu0 %v1283
      %1539 = vmatprep.subr.bf16.mxu0 0
      %1540 = vmatpush1.bf16.msra.mxu0 %v1284
      %1541 = vmatprep.subr.bf16.mxu0 0
      %1542 = vmatpush1.bf16.msra.mxu0 %v1285
      %1543 = vmatprep.subr.bf16.mxu0 0
      %1544 = vmatpush1.bf16.msra.mxu0 %v1286
      %1545 = vmatprep.mubr.bf16.mxu0 %v884
      %1546 = vmatmul.mubr.bf16.gmra.mrb[0].mxu0 %v883
      %v1547 = vpop.f32.mrb[0].mxu0
      %v1548 = vadd.f32 %v1483, %v1547
      %v1549 = vpop.f32.mrb[0].mxu0
      %v1550 = vpop.f32.mrb[0].mxu0
      %v1551 = vadd.f32 %v1486, %v1550
      %v1552 = vpop.f32.mrb[0].mxu0
      %1553 = vmatprep.mubr.bf16.mxu0 %v893
      %1554 = vmatmul.mubr.bf16.gmra.mrb[0].mxu0 %v892
      %v1555 = vpop.f32.mrb[0].mxu0
      %v1556 = vadd.f32 %v1491, %v1555
      %v1557 = vpop.f32.mrb[0].mxu0
      %v1558 = vpop.f32.mrb[0].mxu0
      %v1559 = vadd.f32 %v1494, %v1558
      %v1560 = vpop.f32.mrb[0].mxu0
      %1561 = vmatprep.mubr.bf16.mxu0 %v902
      %1562 = vmatmul.mubr.bf16.gmra.mrb[0].mxu0 %v901
      %v1563 = vpop.f32.mrb[0].mxu0
      %v1564 = vadd.f32 %v1499, %v1563
      %v1565 = vpop.f32.mrb[0].mxu0
      %v1566 = vpop.f32.mrb[0].mxu0
      %v1567 = vadd.f32 %v1502, %v1566
      %v1568 = vpop.f32.mrb[0].mxu0
      %1569 = vmatprep.mubr.bf16.mxu0 %v911
      %1570 = vmatmul.mubr.bf16.gmra.mrb[0].mxu0 %v910
      %v1571 = vpop.f32.mrb[0].mxu0
      %v1572 = vadd.f32 %v1507, %v1571
      %v1573 = vpop.f32.mrb[0].mxu0
      %v1574 = vpop.f32.mrb[0].mxu0
      %v1575 = vadd.f32 %v1510, %v1574
      %v1576 = vpop.f32.mrb[0].mxu0
      %1577 = vdwg.mxu0
      %1578 = vmatprep.subr.bf16.mxu0 0
      %1579 = vmatpush1.bf16.msra.mxu0 %v1287
      %1580 = vmatprep.subr.bf16.mxu0 0
      %1581 = vmatpush1.bf16.msra.mxu0 %v1288
      %1582 = vmatprep.subr.bf16.mxu0 0
      %1583 = vmatpush1.bf16.msra.mxu0 %v1289
      %1584 = vmatprep.subr.bf16.mxu0 0
      %1585 = vmatpush1.bf16.msra.mxu0 %v1290
      %1586 = vmatprep.subr.bf16.mxu0 0
      %1587 = vmatpush1.bf16.msra.mxu0 %v1291
      %1588 = vmatprep.subr.bf16.mxu0 0
      %1589 = vmatpush1.bf16.msra.mxu0 %v1292
      %1590 = vmatprep.subr.bf16.mxu0 0
      %1591 = vmatpush1.bf16.msra.mxu0 %v1293
      %1592 = vmatprep.subr.bf16.mxu0 0
      %1593 = vmatpush1.bf16.msra.mxu0 %v1294
      %1594 = vmatprep.subr.bf16.mxu0 0
      %1595 = vmatpush1.bf16.msra.mxu0 %v1295
      %1596 = vmatprep.subr.bf16.mxu0 0
      %1597 = vmatpush1.bf16.msra.mxu0 %v1296
      %1598 = vmatprep.subr.bf16.mxu0 0
      %1599 = vmatpush1.bf16.msra.mxu0 %v1297
      %1600 = vmatprep.subr.bf16.mxu0 0
      %1601 = vmatpush1.bf16.msra.mxu0 %v1298
      %1602 = vmatprep.subr.bf16.mxu0 0
      %1603 = vmatpush1.bf16.msra.mxu0 %v1299
      %1604 = vmatprep.subr.bf16.mxu0 0
      %1605 = vmatpush1.bf16.msra.mxu0 %v1300
      %1606 = vmatprep.subr.bf16.mxu0 0
      %1607 = vmatpush1.bf16.msra.mxu0 %v1301
      %1608 = vmatprep.subr.bf16.mxu0 0
      %1609 = vmatpush1.bf16.msra.mxu0 %v1302
      %1610 = vmatprep.mubr.bf16.mxu0 %v886
      %1611 = vmatmul.mubr.bf16.gmra.mrb[0].mxu0 %v885
      %v1612 = vpop.f32.mrb[0].mxu0
      %v1613 = vadd.f32 %v1548, %v1612
      %v1614 = vpop.f32.mrb[0].mxu0
      %v1615 = vpop.f32.mrb[0].mxu0
      %v1616 = vadd.f32 %v1551, %v1615
      %v1617 = vpop.f32.mrb[0].mxu0
      %1618 = vmatprep.mubr.bf16.mxu0 %v895
      %1619 = vmatmul.mubr.bf16.gmra.mrb[0].mxu0 %v894
      %v1620 = vpop.f32.mrb[0].mxu0
      %v1621 = vadd.f32 %v1556, %v1620
      %v1622 = vpop.f32.mrb[0].mxu0
      %v1623 = vpop.f32.mrb[0].mxu0
      %v1624 = vadd.f32 %v1559, %v1623
      %v1625 = vpop.f32.mrb[0].mxu0
      %1626 = vmatprep.mubr.bf16.mxu0 %v904
      %1627 = vmatmul.mubr.bf16.gmra.mrb[0].mxu0 %v903
      %v1628 = vpop.f32.mrb[0].mxu0
      %v1629 = vadd.f32 %v1564, %v1628
      %v1630 = vpop.f32.mrb[0].mxu0
      %v1631 = vpop.f32.mrb[0].mxu0
      %v1632 = vadd.f32 %v1567, %v1631
      %v1633 = vpop.f32.mrb[0].mxu0
      %1634 = vmatprep.mubr.bf16.mxu0 %v913
      %1635 = vmatmul.mubr.bf16.gmra.mrb[0].mxu0 %v912
      %v1636 = vpop.f32.mrb[0].mxu0
      %v1637 = vadd.f32 %v1572, %v1636
      %v1638 = vpop.f32.mrb[0].mxu0
      %v1639 = vpop.f32.mrb[0].mxu0
      %v1640 = vadd.f32 %v1575, %v1639
      %v1641 = vpop.f32.mrb[0].mxu0
      %1642 = vdwg.mxu0
      %1643 = vmatprep.subr.bf16.mxu0 0
      %1644 = vmatpush1.bf16.msra.mxu0 %v1303
      %1645 = vmatprep.subr.bf16.mxu0 0
      %1646 = vmatpush1.bf16.msra.mxu0 %v1304
      %1647 = vmatprep.subr.bf16.mxu0 0
      %1648 = vmatpush1.bf16.msra.mxu0 %v1305
      %1649 = vmatprep.subr.bf16.mxu0 0
      %1650 = vmatpush1.bf16.msra.mxu0 %v1306
      %1651 = vmatprep.subr.bf16.mxu0 0
      %1652 = vmatpush1.bf16.msra.mxu0 %v1307
      %1653 = vmatprep.subr.bf16.mxu0 0
      %1654 = vmatpush1.bf16.msra.mxu0 %v1308
      %1655 = vmatprep.subr.bf16.mxu0 0
      %1656 = vmatpush1.bf16.msra.mxu0 %v1309
      %1657 = vmatprep.subr.bf16.mxu0 0
      %1658 = vmatpush1.bf16.msra.mxu0 %v1310
      %1659 = vmatprep.subr.bf16.mxu0 0
      %1660 = vmatpush1.bf16.msra.mxu0 0
      %1661 = vmatprep.subr.bf16.mxu0 0
      %1662 = vmatpush1.bf16.msra.mxu0 0
      %1663 = vmatprep.subr.bf16.mxu0 0
      %1664 = vmatpush1.bf16.msra.mxu0 0
      %1665 = vmatprep.subr.bf16.mxu0 0
      %1666 = vmatpush1.bf16.msra.mxu0 0
      %1667 = vmatprep.subr.bf16.mxu0 0
      %1668 = vmatpush1.bf16.msra.mxu0 0
      %1669 = vmatprep.subr.bf16.mxu0 0
      %1670 = vmatpush1.bf16.msra.mxu0 0
      %1671 = vmatprep.subr.bf16.mxu0 0
      %1672 = vmatpush1.bf16.msra.mxu0 0
      %1673 = vmatprep.subr.bf16.mxu0 0
      %1674 = vmatpush1.bf16.msra.mxu0 0
      %1675 = vmatprep.mubr.bf16.mxu0 0
      %1676 = vmatmul.mubr.bf16.gmra.mrb[0].mxu0 %v887
      %v1677 = vpop.f32.mrb[0].mxu0
      %v1678 = vadd.f32 %v1613, %v1677
      %v1679 = vpop.f32.mrb[0].mxu0
      %v1680 = vpop.f32.mrb[0].mxu0
      %v1681 = vadd.f32 %v1616, %v1680
      %v1682 = vpop.f32.mrb[0].mxu0
      %1683 = vmatprep.mubr.bf16.mxu0 0
      %1684 = vmatmul.mubr.bf16.gmra.mrb[0].mxu0 %v896
      %v1685 = vpop.f32.mrb[0].mxu0
      %v1686 = vadd.f32 %v1621, %v1685
      %v1687 = vpop.f32.mrb[0].mxu0
      %v1688 = vpop.f32.mrb[0].mxu0
      %v1689 = vadd.f32 %v1624, %v1688
      %v1690 = vpop.f32.mrb[0].mxu0
      %1691 = vmatprep.mubr.bf16.mxu0 0
      %1692 = vmatmul.mubr.bf16.gmra.mrb[0].mxu0 %v905
      %v1693 = vpop.f32.mrb[0].mxu0
      %v1694 = vadd.f32 %v1629, %v1693
      %v1695 = vpop.f32.mrb[0].mxu0
      %v1696 = vpop.f32.mrb[0].mxu0
      %v1697 = vadd.f32 %v1632, %v1696
      %v1698 = vpop.f32.mrb[0].mxu0
      %1699 = vmatprep.mubr.bf16.mxu0 0
      %1700 = vmatmul.mubr.bf16.gmra.mrb[0].mxu0 %v914
      %v1701 = vpop.f32.mrb[0].mxu0
      %v1702 = vadd.f32 %v1637, %v1701
      %v1703 = vpop.f32.mrb[0].mxu0
      %v1704 = vpop.f32.mrb[0].mxu0
      %v1705 = vadd.f32 %v1640, %v1704
      %v1706 = vpop.f32.mrb[0].mxu0
      %1707 = vdwg.mxu0
      %v1708 = vld [vmem:[%s213] sm:$0xf]
      %v1709 = vld [vmem:[%s213 + $0x4] sm:$0xf]
      %v1710 = vld [vmem:[%s213 + $0x8] sm:$0xf]
      %v1711 = vld [vmem:[%s213 + $0xc] sm:$0xf]
      %v1712 = vld [vmem:[%s213 + $0x10] sm:$0xf]
      %v1713 = vld [vmem:[%s213 + $0x14] sm:$0xf]
      %v1714 = vld [vmem:[%s213 + $0x18] sm:$0xf]
      %v1715 = vld [vmem:[%s213 + $0x1c] sm:$0xf]
      %v1716 = vunpack.c.l.bf16 %v1708
      %v1717 = vunpack.c.l.bf16 %v1709
      %v1718 = vunpack.c.l.bf16 %v1710
      %v1719 = vunpack.c.l.bf16 %v1711
      %v1720 = vunpack.c.l.bf16 %v1712
      %v1721 = vunpack.c.l.bf16 %v1713
      %v1722 = vunpack.c.l.bf16 %v1714
      %v1723 = vunpack.c.l.bf16 %v1715
      %v1724 = vadd.f32 %v1678, %v1716
      %v1725 = vadd.f32 %v1681, %v1717
      %v1726 = vadd.f32 %v1686, %v1718
      %v1727 = vadd.f32 %v1689, %v1719
      %v1728 = vadd.f32 %v1694, %v1720
      %v1729 = vadd.f32 %v1697, %v1721
      %v1730 = vadd.f32 %v1702, %v1722
      %v1731 = vadd.f32 %v1705, %v1723
      %v1732 = vmax.f32 %v1724, 0.0
      %v1733 = vmax.f32 %v1725, 0.0
      %v1734 = vmax.f32 %v1726, 0.0
      %v1735 = vmax.f32 %v1727, 0.0
      %v1736 = vmax.f32 %v1728, 0.0
      %v1737 = vmax.f32 %v1729, 0.0
      %v1738 = vmax.f32 %v1730, 0.0
      %v1739 = vmax.f32 %v1731, 0.0
      %1740 = vst [vmem:[%s219] sm:$0xff] %v1732
      %1741 = vst [vmem:[%s219 + $0x8] sm:$0xff] %v1733
      %1742 = vst [vmem:[%s219 + $0x10] sm:$0xff] %v1734
      %1743 = vst [vmem:[%s219 + $0x18] sm:$0xff] %v1735
      %1744 = vst [vmem:[%s219 + $0x20] sm:$0xff] %v1736
      %1745 = vst [vmem:[%s219 + $0x28] sm:$0xff] %v1737
      %1746 = vst [vmem:[%s219 + $0x30] sm:$0xff] %v1738
      %1747 = vst [vmem:[%s219 + $0x38] sm:$0xff] %v1739
      %s1748 = smul.u32 8, %s15
      %p1749 = scmp.lt.s32.totalorder %s1748, 15
      %s1750 = scalar_select %p1749, %s1748, 15
      %s1751 = smul.addr %s1750, 8
      %s1752 = scalar_lea.vmem %s4, %s1751
      // Predicated region
      $region37: #{basic_block_forward.5} parent=35 // pred_check
        %p1753 = pneg %p127
      $region38: #{basic_block_forward.5} parent=35 // pred_check_branch
        %1755 = sbr.rel (%p1753) target = $region40
      $region39: #{basic_block_forward.5} parent=35 // pred_region
        %s1756 = smul.u32 8, %s15
      $region40: #{basic_block_forward.5} parent=35 // pred_fallthru
        _
    $region36: #{basic_block_forward.5} parent=5 // pred_fallthru
      _
    %p1757 = scmp.le.s32.totalorder 2, %s10
    // Predicated region
    $region41: #{basic_block_forward.5} parent=5 // pred_check
      %p1758 = pneg %p1757
    $region42: #{basic_block_forward.5} parent=5 // pred_check_branch
      %1760 = sbr.rel (%p1758) target = $region44
    $region43: #{basic_block_forward.5} parent=5 // pred_region
      %s1761 = ssub.s32 %s10, 2
      // Predicated region
      $region45: #{basic_block_forward.5} parent=43 // pred_check
        %p1762 = pneg %p133
      $region46: #{basic_block_forward.5} parent=43 // pred_check_branch
        %1764 = sbr.rel (%p1762) target = $region48
      $region47: #{basic_block_forward.5} parent=43 // pred_region
        %s1765 = smul.u32 8, %s16
        %p1766 = scmp.lt.s32.totalorder %s1765, 15
        %s1767 = scalar_select %p1766, %s1765, 15
        %s1768 = smul.addr %s1767, 8
        %s1769 = scalar_lea.vmem %s4, %s1768
      $region48: #{basic_block_forward.5} parent=43 // pred_fallthru
        _
    $region44: #{basic_block_forward.5} parent=5 // pred_fallthru
      _
  $region6: #{basic_block_forward.5} parent=0 // loop_footer
    %s14 = sadd.s32 1, %s10
  $region7: #{basic_block_forward.5} parent=0 // loop_footer_branch
    %9 = sbr.rel target = $region3
  $region8: #{basic_block_forward.5} parent=0 // loop_exit
    _

</llo_original>
